<compile_context>
chip_gen: v7x
topology: tpu7x:2x2x1
jax: 0.10.0
libtpu: 0.0.40
codegen_flags: <defaults>
</compile_context>

<pallas_src>
import functools

import jax
import jax.numpy as jnp
from jax import lax
from jax.experimental import pallas as pl
from jax.experimental.pallas import tpu as pltpu


def _lstm_decoder_kernel(tile_t, hidden_size,
                         x_ref, h0_ref, c0_ref,
                         w_ih_ref, w_hh_ref, b_ref,
                         w_p_ref, b_p_ref, w_r_ref, b_r_ref,
                         ps_ref, rs_ref,
                         h_scr, c_scr):
    H = hidden_size
    tile_b = h_scr.shape[0]

    # Initialize the recurrent state at the start of each batch-block's
    # time sweep (time is the innermost, "arbitrary" grid axis).
    @pl.when(pl.program_id(1) == 0)
    def _():
        h_scr[...] = h0_ref[0]
        c_scr[...] = c0_ref[0]

    # Weights are VMEM-resident (constant index_map -> no re-DMA per step).
    w_ih = w_ih_ref[...]          # (N_R, 4H)   pre-transposed on host
    w_hh = w_hh_ref[...]          # (H,   4H)   pre-transposed on host
    w_p = w_p_ref[...]            # (H, 1)
    b_p = b_p_ref[...]            # (1, 1)
    w_r = w_r_ref[...]            # (H, N_R)
    b_r = b_r_ref[...]            # (1, N_R)
    # Hoist the bias broadcast out of the timestep loop.
    bias = jnp.broadcast_to(b_ref[...], (tile_b, 4 * H))

    def step(tt, carry):
        x_t = x_ref[tt]                                   # (TILE_B, N_R)
        h_prev = h_scr[...]
        c_prev = c_scr[...]

        gates = (jnp.dot(x_t, w_ih, preferred_element_type=jnp.float32)
                 + jnp.dot(h_prev, w_hh, preferred_element_type=jnp.float32)
                 + bias)                                  # (TILE_B, 4H)

        # PyTorch LSTM gate order: i, f, g, o.
        i_g = jax.nn.sigmoid(gates[:, 0 * H:1 * H])
        f_g = jax.nn.sigmoid(gates[:, 1 * H:2 * H])
        g_g = jnp.tanh(gates[:, 2 * H:3 * H])
        o_g = jax.nn.sigmoid(gates[:, 3 * H:4 * H])

        c_t = f_g * c_prev + i_g * g_g
        h_t = o_g * jnp.tanh(c_t)
        h_scr[...] = h_t
        c_scr[...] = c_t

        # dense_p -> sigmoid : (TILE_B, 1)
        p = jax.nn.sigmoid(
            jnp.dot(h_t, w_p, preferred_element_type=jnp.float32) + b_p)
        ps_ref[tt] = p.astype(ps_ref.dtype)

        # dense_r -> softmax over relations : (TILE_B, N_R)
        # TODO(synk): nn.Softmax() with no dim on a 3-D tensor legacy-defaults
        # to dim=0; we implement the per-relation softmax (dim=-1) the
        # docstring intends.
        logits = jnp.dot(h_t, w_r, preferred_element_type=jnp.float32) + b_r
        logits = logits - jnp.max(logits, axis=-1, keepdims=True)
        e = jnp.exp(logits)
        rs = e / jnp.sum(e, axis=-1, keepdims=True)
        rs_ref[tt] = rs.astype(rs_ref.dtype)
        return carry

    # Short, fixed trip count -> unrolled fori_loop (LLO scheduler visibility).
    lax.fori_loop(0, tile_t, step, 0, unroll=True)


def lstm_decoder_forward(x, hidden, params, *, tile_t=None, tile_b=None):
    """Pallas forward for LSTM_Decoder.

    x:      (T, B, N_R) float32 (seq-first, like nn.LSTM default)
    hidden: (h0, c0), each (1, B, H)
    params: PyTorch-layout tensors:
        w_ih (4H, N_R), w_hh (4H, H), b_ih (4H,), b_hh (4H,),
        w_p (1, H), b_p (1,), w_r (N_R, H), b_r (N_R,)
    Returns (ps, rs) with shapes (T, B, 1), (T, B, N_R).
    """
    w_ih, w_hh, b_ih, b_hh, w_p, b_p, w_r, b_r = params
    h0, c0 = hidden
    T, B, N_R = x.shape
    H = w_hh.shape[1]
    f32 = jnp.float32

    # --- Host-side layout prep (no in-kernel transposes, fused LSTM bias). ---
    w_ih_t = jnp.asarray(w_ih, f32).T                      # (N_R, 4H)
    w_hh_t = jnp.asarray(w_hh, f32).T                      # (H,   4H)
    b_gates = (jnp.asarray(b_ih, f32) + jnp.asarray(b_hh, f32)).reshape(1, 4 * H)
    w_p_t = jnp.asarray(w_p, f32).T                        # (H, 1)
    b_p2 = jnp.asarray(b_p, f32).reshape(1, 1)
    w_r_t = jnp.asarray(w_r, f32).T                        # (H, N_R)
    b_r2 = jnp.asarray(b_r, f32).reshape(1, N_R)

    # --- Tile selection: batch = parallel axis, time = sequential axis. ---
    if tile_b is None:
        tile_b = B if B <= 128 else 128
    if tile_t is None:
        tile_t = T if T <= 4 else 4
    assert B % tile_b == 0 and T % tile_t == 0, "tiles must divide T and B"
    assert tile_b == B or tile_b % 8 == 0, "batch tile must be sublane-aligned"
    grid = (B // tile_b, T // tile_t)

    kernel = functools.partial(_lstm_decoder_kernel, tile_t, H)

    def full(shape):
        return pl.BlockSpec(shape, lambda b, t: (0,) * len(shape))

    in_specs = [
        pl.BlockSpec((tile_t, tile_b, N_R), lambda b, t: (t, b, 0)),   # x
        pl.BlockSpec((1, tile_b, H), lambda b, t: (0, b, 0)),          # h0
        pl.BlockSpec((1, tile_b, H), lambda b, t: (0, b, 0)),          # c0
        full((N_R, 4 * H)),    # w_ih^T
        full((H, 4 * H)),      # w_hh^T
        full((1, 4 * H)),      # fused LSTM bias
        full((H, 1)),          # w_p^T
        full((1, 1)),          # b_p
        full((H, N_R)),        # w_r^T
        full((1, N_R)),        # b_r
    ]
    out_specs = [
        pl.BlockSpec((tile_t, tile_b, 1), lambda b, t: (t, b, 0)),     # ps
        pl.BlockSpec((tile_t, tile_b, N_R), lambda b, t: (t, b, 0)),   # rs
    ]
    out_shape = (
        jax.ShapeDtypeStruct((T, B, 1), f32),
        jax.ShapeDtypeStruct((T, B, N_R), f32),
    )

    flops_per_row = 2 * N_R * 4 * H + 2 * H * 4 * H + 2 * H + 2 * H * N_R
    cost = pl.CostEstimate(
        flops=int(T * B * flops_per_row),
        transcendentals=int(T * B * (5 * H + 1 + N_R)),
        bytes_accessed=int(4 * (x.size + 2 * B * H + w_ih_t.size + w_hh_t.size
                                + b_gates.size + w_p_t.size + b_p2.size
                                + w_r_t.size + b_r2.size + T * B * (1 + N_R))),
    )

    ps, rs = pl.pallas_call(
        kernel,
        out_shape=out_shape,
        grid_spec=pltpu.PrefetchScalarGridSpec(
            num_scalar_prefetch=0,
            grid=grid,
            in_specs=in_specs,
            out_specs=out_specs,
            scratch_shapes=[pltpu.VMEM((tile_b, H), f32),   # h state
                            pltpu.VMEM((tile_b, H), f32)],  # c state
        ),
        compiler_params=pltpu.CompilerParams(
            dimension_semantics=("parallel", "arbitrary"),
            vmem_limit_bytes=32 * 1024 * 1024,
        ),
        cost_estimate=cost,
    )(x.astype(f32), h0.astype(f32), c0.astype(f32),
      w_ih_t, w_hh_t, b_gates, w_p_t, b_p2, w_r_t, b_r2)
    return ps, rs


def _reference_forward(x, hidden, params):
    """Pure-JAX reference mirroring the PyTorch module (f32, highest precision)."""
    w_ih, w_hh, b_ih, b_hh, w_p, b_p, w_r, b_r = params
    hp = lax.Precision.HIGHEST
    h = hidden[0][0]
    c = hidden[1][0]
    T = x.shape[0]
    H = h.shape[-1]
    hs = []
    for t in range(T):
        gates = (jnp.dot(x[t], w_ih.T, precision=hp) + b_ih
                 + jnp.dot(h, w_hh.T, precision=hp) + b_hh)
        i = jax.nn.sigmoid(gates[:, :H])
        f = jax.nn.sigmoid(gates[:, H:2 * H])
        g = jnp.tanh(gates[:, 2 * H:3 * H])
        o = jax.nn.sigmoid(gates[:, 3 * H:])
        c = f * c + i * g
        h = o * jnp.tanh(c)
        hs.append(h)
    lstm_out = jnp.stack(hs)                                        # (T, B, H)
    ps = jax.nn.sigmoid(jnp.dot(lstm_out, w_p.T, precision=hp) + b_p)
    rs = jax.nn.softmax(jnp.dot(lstm_out, w_r.T, precision=hp) + b_r, axis=-1)
    return ps, rs


if __name__ == "__main__":
    # Small shapes consistent with the module.
    T = 8      # hop length (sequence)
    B = 16     # batch size
    N_R = 16   # input_size (number of relations)
    H = 32     # hidden_size

    key = jax.random.PRNGKey(0)
    ks = jax.random.split(key, 11)
    scale = 0.1

    # PyTorch-layout parameters (nn.LSTM / nn.Linear shapes).
    w_ih = jax.random.normal(ks[0], (4 * H, N_R), jnp.float32) * scale
    w_hh = jax.random.normal(ks[1], (4 * H, H), jnp.float32) * scale
    b_ih = jax.random.normal(ks[2], (4 * H,), jnp.float32) * scale
    b_hh = jax.random.normal(ks[3], (4 * H,), jnp.float32) * scale
    w_p = jax.random.normal(ks[4], (1, H), jnp.float32) * scale
    b_p = jax.random.normal(ks[5], (1,), jnp.float32) * scale
    w_r = jax.random.normal(ks[6], (N_R, H), jnp.float32) * scale
    b_r = jax.random.normal(ks[7], (N_R,), jnp.float32) * scale
    params = (w_ih, w_hh, b_ih, b_hh, w_p, b_p, w_r, b_r)

    # One-hot relation embeddings, as the module docstring describes.
    rel_ids = jax.random.randint(ks[8], (T, B), 0, N_R)
    x = jax.nn.one_hot(rel_ids, N_R, dtype=jnp.float32)            # (T, B, N_R)
    h0 = jax.random.normal(ks[9], (1, B, H), jnp.float32) * scale
    c0 = jax.random.normal(ks[10], (1, B, H), jnp.float32) * scale

    ps, rs = lstm_decoder_forward(x, (h0, c0), params, tile_t=4, tile_b=8)
    ps, rs = jax.block_until_ready((ps, rs))

    ps_ref, rs_ref = _reference_forward(x, (h0, c0), params)
    assert ps.shape == (T, B, 1) and rs.shape == (T, B, N_R)
    assert jnp.allclose(ps, ps_ref, atol=2e-3, rtol=2e-3), "ps mismatch"
    assert jnp.allclose(rs, rs_ref, atol=2e-3, rtol=2e-3), "rs mismatch"
    assert jnp.allclose(jnp.sum(rs, axis=-1), 1.0, atol=1e-3), "softmax not normalized"

    print("KERNEL_OK")
</pallas_src>

<mosaic_0001>
module attributes {stable_mosaic.version = 11 : i64} {
  func.func @_lstm_decoder_kernel(%arg0: i32, %arg1: i32, %arg2: memref<4x8x16xf32, #tpu.memory_space<vmem>>, %arg3: memref<1x8x32xf32, #tpu.memory_space<vmem>>, %arg4: memref<1x8x32xf32, #tpu.memory_space<vmem>>, %arg5: memref<16x128xf32, #tpu.memory_space<vmem>>, %arg6: memref<32x128xf32, #tpu.memory_space<vmem>>, %arg7: memref<1x128xf32, #tpu.memory_space<vmem>>, %arg8: memref<32x1xf32, #tpu.memory_space<vmem>>, %arg9: memref<1x1xf32, #tpu.memory_space<vmem>>, %arg10: memref<32x16xf32, #tpu.memory_space<vmem>>, %arg11: memref<1x16xf32, #tpu.memory_space<vmem>>, %arg12: memref<4x8x1xf32, #tpu.memory_space<vmem>>, %arg13: memref<4x8x16xf32, #tpu.memory_space<vmem>>, %arg14: memref<8x32xf32, #tpu.memory_space<vmem>>, %arg15: memref<8x32xf32, #tpu.memory_space<vmem>>) attributes {dimension_semantics = [#tpu.dimension_semantics<parallel>, #tpu.dimension_semantics<arbitrary>], iteration_bounds = array<i64: 2, 2>, scalar_prefetch = 0 : i64, scratch_operands = 2 : i64, tpu.core_type = #tpu.core_type<tc>, window_params = [{transform_indices = @transform_0, window_bounds = array<i64: 4, 8, 16>}, {transform_indices = @transform_1, window_bounds = array<i64: 1, 8, 32>}, {transform_indices = @transform_2, window_bounds = array<i64: 1, 8, 32>}, {pipeline_mode = #tpu.pipeline_mode<synchronous>, transform_indices = @transform_3, window_bounds = array<i64: 16, 128>}, {pipeline_mode = #tpu.pipeline_mode<synchronous>, transform_indices = @transform_4, window_bounds = array<i64: 32, 128>}, {pipeline_mode = #tpu.pipeline_mode<synchronous>, transform_indices = @transform_5, window_bounds = array<i64: 1, 128>}, {pipeline_mode = #tpu.pipeline_mode<synchronous>, transform_indices = @transform_6, window_bounds = array<i64: 32, 1>}, {pipeline_mode = #tpu.pipeline_mode<synchronous>, transform_indices = @transform_7, window_bounds = array<i64: 1, 1>}, {pipeline_mode = #tpu.pipeline_mode<synchronous>, transform_indices = @transform_8, window_bounds = array<i64: 32, 16>}, {pipeline_mode = #tpu.pipeline_mode<synchronous>, transform_indices = @transform_9, window_bounds = array<i64: 1, 16>}, {transform_indices = @transform_10, window_bounds = array<i64: 4, 8, 1>}, {transform_indices = @transform_11, window_bounds = array<i64: 4, 8, 16>}]} {
    %c0_i32 = arith.constant 0 : i32
    %0 = arith.cmpi eq, %arg1, %c0_i32 : i32
    %1 = arith.extui %0 : i1 to i32
    %c0_i32_0 = arith.constant 0 : i32
    %2 = arith.cmpi ne, %1, %c0_i32_0 : i32
    scf.if %2 {
      %c0_110 = arith.constant 0 : index
      %c0_111 = arith.constant 0 : index
      %c0_112 = arith.constant 0 : index
      %268 = vector.load %arg3[%c0_110, %c0_111, %c0_112] : memref<1x8x32xf32, #tpu.memory_space<vmem>>, vector<1x8x32xf32>
      %269 = vector.shape_cast %268 : vector<1x8x32xf32> to vector<8x32xf32>
      %c0_113 = arith.constant 0 : index
      %c0_114 = arith.constant 0 : index
      %270 = vector.load %arg14[%c0_113, %c0_114] : memref<8x32xf32, #tpu.memory_space<vmem>>, vector<8x32xf32>
      tpu.vector_store %arg14[%c0_113, %c0_114], %269 {strides = array<i32>} : memref<8x32xf32, #tpu.memory_space<vmem>>, vector<8x32xf32>,
      %c0_115 = arith.constant 0 : index
      %c0_116 = arith.constant 0 : index
      %c0_117 = arith.constant 0 : index
      %271 = vector.load %arg4[%c0_115, %c0_116, %c0_117] : memref<1x8x32xf32, #tpu.memory_space<vmem>>, vector<1x8x32xf32>
      %272 = vector.shape_cast %271 : vector<1x8x32xf32> to vector<8x32xf32>
      %c0_118 = arith.constant 0 : index
      %c0_119 = arith.constant 0 : index
      %273 = vector.load %arg15[%c0_118, %c0_119] : memref<8x32xf32, #tpu.memory_space<vmem>>, vector<8x32xf32>
      tpu.vector_store %arg15[%c0_118, %c0_119], %272 {strides = array<i32>} : memref<8x32xf32, #tpu.memory_space<vmem>>, vector<8x32xf32>,
    } else {
    }
    %c0 = arith.constant 0 : index
    %c0_1 = arith.constant 0 : index
    %3 = vector.load %arg5[%c0, %c0_1] : memref<16x128xf32, #tpu.memory_space<vmem>>, vector<16x128xf32>
    %c0_2 = arith.constant 0 : index
    %c0_3 = arith.constant 0 : index
    %4 = vector.load %arg6[%c0_2, %c0_3] : memref<32x128xf32, #tpu.memory_space<vmem>>, vector<32x128xf32>
    %c0_4 = arith.constant 0 : index
    %c0_5 = arith.constant 0 : index
    %5 = vector.load %arg8[%c0_4, %c0_5] : memref<32x1xf32, #tpu.memory_space<vmem>>, vector<32x1xf32>
    %c0_6 = arith.constant 0 : index
    %c0_7 = arith.constant 0 : index
    %6 = vector.load %arg9[%c0_6, %c0_7] : memref<1x1xf32, #tpu.memory_space<vmem>>, vector<1x1xf32>
    %c0_8 = arith.constant 0 : index
    %c0_9 = arith.constant 0 : index
    %7 = vector.load %arg10[%c0_8, %c0_9] : memref<32x16xf32, #tpu.memory_space<vmem>>, vector<32x16xf32>
    %c0_10 = arith.constant 0 : index
    %c0_11 = arith.constant 0 : index
    %8 = vector.load %arg11[%c0_10, %c0_11] : memref<1x16xf32, #tpu.memory_space<vmem>>, vector<1x16xf32>
    %c0_12 = arith.constant 0 : index
    %c0_13 = arith.constant 0 : index
    %9 = vector.load %arg7[%c0_12, %c0_13] : memref<1x128xf32, #tpu.memory_space<vmem>>, vector<1x128xf32>
    %10 = vector.shape_cast %9 : vector<1x128xf32> to vector<1x128xf32>
    %11 = vector.broadcast %10 : vector<1x128xf32> to vector<8x128xf32>
    %c0_i32_14 = arith.constant 0 : i32
    %12 = arith.index_cast %c0_i32_14 : i32 to index
    %c0_15 = arith.constant 0 : index
    %c0_16 = arith.constant 0 : index
    %13 = vector.load %arg2[%12, %c0_15, %c0_16] : memref<4x8x16xf32, #tpu.memory_space<vmem>>, vector<1x8x16xf32>
    %14 = vector.shape_cast %13 : vector<1x8x16xf32> to vector<8x16xf32>
    %c0_17 = arith.constant 0 : index
    %c0_18 = arith.constant 0 : index
    %15 = vector.load %arg14[%c0_17, %c0_18] : memref<8x32xf32, #tpu.memory_space<vmem>>, vector<8x32xf32>
    %c0_19 = arith.constant 0 : index
    %c0_20 = arith.constant 0 : index
    %16 = vector.load %arg15[%c0_19, %c0_20] : memref<8x32xf32, #tpu.memory_space<vmem>>, vector<8x32xf32>
    %cst = arith.constant dense<0.000000e+00> : vector<8x128xf32>
    %17 = tpu.matmul %14, %3, %cst {dimension_numbers = #tpu.dot_dimension_numbers<[1], [0], [0], [1], [0, 0, 1, 1], [], []>} : vector<8x16xf32>, vector<16x128xf32>, vector<8x128xf32> -> vector<8x128xf32>
    %cst_21 = arith.constant dense<0.000000e+00> : vector<8x128xf32>
    %18 = tpu.matmul %15, %4, %cst_21 {dimension_numbers = #tpu.dot_dimension_numbers<[1], [0], [0], [1], [0, 0, 1, 1], [], []>} : vector<8x32xf32>, vector<32x128xf32>, vector<8x128xf32> -> vector<8x128xf32>
    %19 = arith.addf %17, %18 : vector<8x128xf32>
    %20 = arith.addf %19, %11 : vector<8x128xf32>
    %21 = vector.extract_strided_slice %20 {offsets = [0, 0], sizes = [8, 32], strides = [1, 1]} : vector<8x128xf32> to vector<8x32xf32>
    %22 = arith.negf %21 : vector<8x32xf32>
    %23 = math.exp %22 : vector<8x32xf32>
    %cst_22 = arith.constant 1.000000e+00 : f32
    %24 = vector.broadcast %cst_22 : f32 to vector<8x32xf32>
    %25 = arith.addf %24, %23 : vector<8x32xf32>
    %26 = arith.divf %24, %25 : vector<8x32xf32>
    %27 = vector.extract_strided_slice %20 {offsets = [0, 32], sizes = [8, 32], strides = [1, 1]} : vector<8x128xf32> to vector<8x32xf32>
    %28 = arith.negf %27 : vector<8x32xf32>
    %29 = math.exp %28 : vector<8x32xf32>
    %cst_23 = arith.constant 1.000000e+00 : f32
    %30 = vector.broadcast %cst_23 : f32 to vector<8x32xf32>
    %31 = arith.addf %30, %29 : vector<8x32xf32>
    %32 = arith.divf %30, %31 : vector<8x32xf32>
    %33 = vector.extract_strided_slice %20 {offsets = [0, 64], sizes = [8, 32], strides = [1, 1]} : vector<8x128xf32> to vector<8x32xf32>
    %34 = math.tanh %33 : vector<8x32xf32>
    %35 = vector.extract_strided_slice %20 {offsets = [0, 96], sizes = [8, 32], strides = [1, 1]} : vector<8x128xf32> to vector<8x32xf32>
    %36 = arith.negf %35 : vector<8x32xf32>
    %37 = math.exp %36 : vector<8x32xf32>
    %cst_24 = arith.constant 1.000000e+00 : f32
    %38 = vector.broadcast %cst_24 : f32 to vector<8x32xf32>
    %39 = arith.addf %38, %37 : vector<8x32xf32>
    %40 = arith.divf %38, %39 : vector<8x32xf32>
    %41 = arith.mulf %32, %16 : vector<8x32xf32>
    %42 = arith.mulf %26, %34 : vector<8x32xf32>
    %43 = arith.addf %41, %42 : vector<8x32xf32>
    %44 = math.tanh %43 : vector<8x32xf32>
    %45 = arith.mulf %40, %44 : vector<8x32xf32>
    %c0_25 = arith.constant 0 : index
    %c0_26 = arith.constant 0 : index
    %46 = vector.load %arg14[%c0_25, %c0_26] : memref<8x32xf32, #tpu.memory_space<vmem>>, vector<8x32xf32>
    tpu.vector_store %arg14[%c0_25, %c0_26], %45 {strides = array<i32>} : memref<8x32xf32, #tpu.memory_space<vmem>>, vector<8x32xf32>,
    %c0_27 = arith.constant 0 : index
    %c0_28 = arith.constant 0 : index
    %47 = vector.load %arg15[%c0_27, %c0_28] : memref<8x32xf32, #tpu.memory_space<vmem>>, vector<8x32xf32>
    tpu.vector_store %arg15[%c0_27, %c0_28], %43 {strides = array<i32>} : memref<8x32xf32, #tpu.memory_space<vmem>>, vector<8x32xf32>,
    %cst_29 = arith.constant dense<0.000000e+00> : vector<8x1xf32>
    %48 = tpu.matmul %45, %5, %cst_29 {dimension_numbers = #tpu.dot_dimension_numbers<[1], [0], [0], [1], [0, 0, 1, 1], [], []>} : vector<8x32xf32>, vector<32x1xf32>, vector<8x1xf32> -> vector<8x1xf32>
    %49 = vector.broadcast %6 : vector<1x1xf32> to vector<8x1xf32>
    %50 = arith.addf %48, %49 : vector<8x1xf32>
    %51 = arith.negf %50 : vector<8x1xf32>
    %52 = math.exp %51 : vector<8x1xf32>
    %cst_30 = arith.constant 1.000000e+00 : f32
    %53 = vector.broadcast %cst_30 : f32 to vector<8x1xf32>
    %54 = arith.addf %53, %52 : vector<8x1xf32>
    %55 = arith.divf %53, %54 : vector<8x1xf32>
    %56 = arith.index_cast %c0_i32_14 : i32 to index
    %c0_31 = arith.constant 0 : index
    %c0_32 = arith.constant 0 : index
    %57 = vector.load %arg12[%56, %c0_31, %c0_32] : memref<4x8x1xf32, #tpu.memory_space<vmem>>, vector<1x8x1xf32>
    %58 = vector.shape_cast %57 : vector<1x8x1xf32> to vector<8x1xf32>
    %59 = vector.shape_cast %55 : vector<8x1xf32> to vector<1x8x1xf32>
    tpu.vector_store %arg12[%56, %c0_31, %c0_32], %59 {strides = array<i32>} : memref<4x8x1xf32, #tpu.memory_space<vmem>>, vector<1x8x1xf32>,
    %cst_33 = arith.constant dense<0.000000e+00> : vector<8x16xf32>
    %60 = tpu.matmul %45, %7, %cst_33 {dimension_numbers = #tpu.dot_dimension_numbers<[1], [0], [0], [1], [0, 0, 1, 1], [], []>} : vector<8x32xf32>, vector<32x16xf32>, vector<8x16xf32> -> vector<8x16xf32>
    %61 = vector.broadcast %8 : vector<1x16xf32> to vector<8x16xf32>
    %62 = arith.addf %60, %61 : vector<8x16xf32>
    %cst_34 = arith.constant dense<0xFF800000> : vector<8xf32>
    %63 = vector.multi_reduction <maximumf>, %62, %cst_34 [1] : vector<8x16xf32> to vector<8xf32>
    %64 = vector.shape_cast %63 : vector<8xf32> to vector<8x1xf32>
    %65 = vector.broadcast %64 : vector<8x1xf32> to vector<8x16xf32>
    %66 = arith.subf %62, %65 : vector<8x16xf32>
    %67 = math.exp %66 : vector<8x16xf32>
    %cst_35 = arith.constant dense<0.000000e+00> : vector<8xf32>
    %68 = vector.multi_reduction <add>, %67, %cst_35 [1] : vector<8x16xf32> to vector<8xf32>
    %69 = vector.shape_cast %68 : vector<8xf32> to vector<8x1xf32>
    %70 = vector.broadcast %69 : vector<8x1xf32> to vector<8x16xf32>
    %71 = arith.divf %67, %70 : vector<8x16xf32>
    %72 = arith.index_cast %c0_i32_14 : i32 to index
    %c0_36 = arith.constant 0 : index
    %c0_37 = arith.constant 0 : index
    %73 = vector.load %arg13[%72, %c0_36, %c0_37] : memref<4x8x16xf32, #tpu.memory_space<vmem>>, vector<1x8x16xf32>
    %74 = vector.shape_cast %73 : vector<1x8x16xf32> to vector<8x16xf32>
    %75 = vector.shape_cast %71 : vector<8x16xf32> to vector<1x8x16xf32>
    tpu.vector_store %arg13[%72, %c0_36, %c0_37], %75 {strides = array<i32>} : memref<4x8x16xf32, #tpu.memory_space<vmem>>, vector<1x8x16xf32>,
    %c1_i32 = arith.constant 1 : i32
    %76 = arith.index_cast %c1_i32 : i32 to index
    %c0_38 = arith.constant 0 : index
    %c0_39 = arith.constant 0 : index
    %77 = vector.load %arg2[%76, %c0_38, %c0_39] : memref<4x8x16xf32, #tpu.memory_space<vmem>>, vector<1x8x16xf32>
    %78 = vector.shape_cast %77 : vector<1x8x16xf32> to vector<8x16xf32>
    %c0_40 = arith.constant 0 : index
    %c0_41 = arith.constant 0 : index
    %79 = vector.load %arg14[%c0_40, %c0_41] : memref<8x32xf32, #tpu.memory_space<vmem>>, vector<8x32xf32>
    %c0_42 = arith.constant 0 : index
    %c0_43 = arith.constant 0 : index
    %80 = vector.load %arg15[%c0_42, %c0_43] : memref<8x32xf32, #tpu.memory_space<vmem>>, vector<8x32xf32>
    %cst_44 = arith.constant dense<0.000000e+00> : vector<8x128xf32>
    %81 = tpu.matmul %78, %3, %cst_44 {dimension_numbers = #tpu.dot_dimension_numbers<[1], [0], [0], [1], [0, 0, 1, 1], [], []>} : vector<8x16xf32>, vector<16x128xf32>, vector<8x128xf32> -> vector<8x128xf32>
    %cst_45 = arith.constant dense<0.000000e+00> : vector<8x128xf32>
    %82 = tpu.matmul %79, %4, %cst_45 {dimension_numbers = #tpu.dot_dimension_numbers<[1], [0], [0], [1], [0, 0, 1, 1], [], []>} : vector<8x32xf32>, vector<32x128xf32>, vector<8x128xf32> -> vector<8x128xf32>
    %83 = arith.addf %81, %82 : vector<8x128xf32>
    %84 = arith.addf %83, %11 : vector<8x128xf32>
    %85 = vector.extract_strided_slice %84 {offsets = [0, 0], sizes = [8, 32], strides = [1, 1]} : vector<8x128xf32> to vector<8x32xf32>
    %86 = arith.negf %85 : vector<8x32xf32>
    %87 = math.exp %86 : vector<8x32xf32>
    %cst_46 = arith.constant 1.000000e+00 : f32
    %88 = vector.broadcast %cst_46 : f32 to vector<8x32xf32>
    %89 = arith.addf %88, %87 : vector<8x32xf32>
    %90 = arith.divf %88, %89 : vector<8x32xf32>
    %91 = vector.extract_strided_slice %84 {offsets = [0, 32], sizes = [8, 32], strides = [1, 1]} : vector<8x128xf32> to vector<8x32xf32>
    %92 = arith.negf %91 : vector<8x32xf32>
    %93 = math.exp %92 : vector<8x32xf32>
    %cst_47 = arith.constant 1.000000e+00 : f32
    %94 = vector.broadcast %cst_47 : f32 to vector<8x32xf32>
    %95 = arith.addf %94, %93 : vector<8x32xf32>
    %96 = arith.divf %94, %95 : vector<8x32xf32>
    %97 = vector.extract_strided_slice %84 {offsets = [0, 64], sizes = [8, 32], strides = [1, 1]} : vector<8x128xf32> to vector<8x32xf32>
    %98 = math.tanh %97 : vector<8x32xf32>
    %99 = vector.extract_strided_slice %84 {offsets = [0, 96], sizes = [8, 32], strides = [1, 1]} : vector<8x128xf32> to vector<8x32xf32>
    %100 = arith.negf %99 : vector<8x32xf32>
    %101 = math.exp %100 : vector<8x32xf32>
    %cst_48 = arith.constant 1.000000e+00 : f32
    %102 = vector.broadcast %cst_48 : f32 to vector<8x32xf32>
    %103 = arith.addf %102, %101 : vector<8x32xf32>
    %104 = arith.divf %102, %103 : vector<8x32xf32>
    %105 = arith.mulf %96, %80 : vector<8x32xf32>
    %106 = arith.mulf %90, %98 : vector<8x32xf32>
    %107 = arith.addf %105, %106 : vector<8x32xf32>
    %108 = math.tanh %107 : vector<8x32xf32>
    %109 = arith.mulf %104, %108 : vector<8x32xf32>
    %c0_49 = arith.constant 0 : index
    %c0_50 = arith.constant 0 : index
    %110 = vector.load %arg14[%c0_49, %c0_50] : memref<8x32xf32, #tpu.memory_space<vmem>>, vector<8x32xf32>
    tpu.vector_store %arg14[%c0_49, %c0_50], %109 {strides = array<i32>} : memref<8x32xf32, #tpu.memory_space<vmem>>, vector<8x32xf32>,
    %c0_51 = arith.constant 0 : index
    %c0_52 = arith.constant 0 : index
    %111 = vector.load %arg15[%c0_51, %c0_52] : memref<8x32xf32, #tpu.memory_space<vmem>>, vector<8x32xf32>
    tpu.vector_store %arg15[%c0_51, %c0_52], %107 {strides = array<i32>} : memref<8x32xf32, #tpu.memory_space<vmem>>, vector<8x32xf32>,
    %cst_53 = arith.constant dense<0.000000e+00> : vector<8x1xf32>
    %112 = tpu.matmul %109, %5, %cst_53 {dimension_numbers = #tpu.dot_dimension_numbers<[1], [0], [0], [1], [0, 0, 1, 1], [], []>} : vector<8x32xf32>, vector<32x1xf32>, vector<8x1xf32> -> vector<8x1xf32>
    %113 = vector.broadcast %6 : vector<1x1xf32> to vector<8x1xf32>
    %114 = arith.addf %112, %113 : vector<8x1xf32>
    %115 = arith.negf %114 : vector<8x1xf32>
    %116 = math.exp %115 : vector<8x1xf32>
    %cst_54 = arith.constant 1.000000e+00 : f32
    %117 = vector.broadcast %cst_54 : f32 to vector<8x1xf32>
    %118 = arith.addf %117, %116 : vector<8x1xf32>
    %119 = arith.divf %117, %118 : vector<8x1xf32>
    %120 = arith.index_cast %c1_i32 : i32 to index
    %c0_55 = arith.constant 0 : index
    %c0_56 = arith.constant 0 : index
    %121 = vector.load %arg12[%120, %c0_55, %c0_56] : memref<4x8x1xf32, #tpu.memory_space<vmem>>, vector<1x8x1xf32>
    %122 = vector.shape_cast %121 : vector<1x8x1xf32> to vector<8x1xf32>
    %123 = vector.shape_cast %119 : vector<8x1xf32> to vector<1x8x1xf32>
    tpu.vector_store %arg12[%120, %c0_55, %c0_56], %123 {strides = array<i32>} : memref<4x8x1xf32, #tpu.memory_space<vmem>>, vector<1x8x1xf32>,
    %cst_57 = arith.constant dense<0.000000e+00> : vector<8x16xf32>
    %124 = tpu.matmul %109, %7, %cst_57 {dimension_numbers = #tpu.dot_dimension_numbers<[1], [0], [0], [1], [0, 0, 1, 1], [], []>} : vector<8x32xf32>, vector<32x16xf32>, vector<8x16xf32> -> vector<8x16xf32>
    %125 = vector.broadcast %8 : vector<1x16xf32> to vector<8x16xf32>
    %126 = arith.addf %124, %125 : vector<8x16xf32>
    %cst_58 = arith.constant dense<0xFF800000> : vector<8xf32>
    %127 = vector.multi_reduction <maximumf>, %126, %cst_58 [1] : vector<8x16xf32> to vector<8xf32>
    %128 = vector.shape_cast %127 : vector<8xf32> to vector<8x1xf32>
    %129 = vector.broadcast %128 : vector<8x1xf32> to vector<8x16xf32>
    %130 = arith.subf %126, %129 : vector<8x16xf32>
    %131 = math.exp %130 : vector<8x16xf32>
    %cst_59 = arith.constant dense<0.000000e+00> : vector<8xf32>
    %132 = vector.multi_reduction <add>, %131, %cst_59 [1] : vector<8x16xf32> to vector<8xf32>
    %133 = vector.shape_cast %132 : vector<8xf32> to vector<8x1xf32>
    %134 = vector.broadcast %133 : vector<8x1xf32> to vector<8x16xf32>
    %135 = arith.divf %131, %134 : vector<8x16xf32>
    %136 = arith.index_cast %c1_i32 : i32 to index
    %c0_60 = arith.constant 0 : index
    %c0_61 = arith.constant 0 : index
    %137 = vector.load %arg13[%136, %c0_60, %c0_61] : memref<4x8x16xf32, #tpu.memory_space<vmem>>, vector<1x8x16xf32>
    %138 = vector.shape_cast %137 : vector<1x8x16xf32> to vector<8x16xf32>
    %139 = vector.shape_cast %135 : vector<8x16xf32> to vector<1x8x16xf32>
    tpu.vector_store %arg13[%136, %c0_60, %c0_61], %139 {strides = array<i32>} : memref<4x8x16xf32, #tpu.memory_space<vmem>>, vector<1x8x16xf32>,
    %c2_i32 = arith.constant 2 : i32
    %140 = arith.index_cast %c2_i32 : i32 to index
    %c0_62 = arith.constant 0 : index
    %c0_63 = arith.constant 0 : index
    %141 = vector.load %arg2[%140, %c0_62, %c0_63] : memref<4x8x16xf32, #tpu.memory_space<vmem>>, vector<1x8x16xf32>
    %142 = vector.shape_cast %141 : vector<1x8x16xf32> to vector<8x16xf32>
    %c0_64 = arith.constant 0 : index
    %c0_65 = arith.constant 0 : index
    %143 = vector.load %arg14[%c0_64, %c0_65] : memref<8x32xf32, #tpu.memory_space<vmem>>, vector<8x32xf32>
    %c0_66 = arith.constant 0 : index
    %c0_67 = arith.constant 0 : index
    %144 = vector.load %arg15[%c0_66, %c0_67] : memref<8x32xf32, #tpu.memory_space<vmem>>, vector<8x32xf32>
    %cst_68 = arith.constant dense<0.000000e+00> : vector<8x128xf32>
    %145 = tpu.matmul %142, %3, %cst_68 {dimension_numbers = #tpu.dot_dimension_numbers<[1], [0], [0], [1], [0, 0, 1, 1], [], []>} : vector<8x16xf32>, vector<16x128xf32>, vector<8x128xf32> -> vector<8x128xf32>
    %cst_69 = arith.constant dense<0.000000e+00> : vector<8x128xf32>
    %146 = tpu.matmul %143, %4, %cst_69 {dimension_numbers = #tpu.dot_dimension_numbers<[1], [0], [0], [1], [0, 0, 1, 1], [], []>} : vector<8x32xf32>, vector<32x128xf32>, vector<8x128xf32> -> vector<8x128xf32>
    %147 = arith.addf %145, %146 : vector<8x128xf32>
    %148 = arith.addf %147, %11 : vector<8x128xf32>
    %149 = vector.extract_strided_slice %148 {offsets = [0, 0], sizes = [8, 32], strides = [1, 1]} : vector<8x128xf32> to vector<8x32xf32>
    %150 = arith.negf %149 : vector<8x32xf32>
    %151 = math.exp %150 : vector<8x32xf32>
    %cst_70 = arith.constant 1.000000e+00 : f32
    %152 = vector.broadcast %cst_70 : f32 to vector<8x32xf32>
    %153 = arith.addf %152, %151 : vector<8x32xf32>
    %154 = arith.divf %152, %153 : vector<8x32xf32>
    %155 = vector.extract_strided_slice %148 {offsets = [0, 32], sizes = [8, 32], strides = [1, 1]} : vector<8x128xf32> to vector<8x32xf32>
    %156 = arith.negf %155 : vector<8x32xf32>
    %157 = math.exp %156 : vector<8x32xf32>
    %cst_71 = arith.constant 1.000000e+00 : f32
    %158 = vector.broadcast %cst_71 : f32 to vector<8x32xf32>
    %159 = arith.addf %158, %157 : vector<8x32xf32>
    %160 = arith.divf %158, %159 : vector<8x32xf32>
    %161 = vector.extract_strided_slice %148 {offsets = [0, 64], sizes = [8, 32], strides = [1, 1]} : vector<8x128xf32> to vector<8x32xf32>
    %162 = math.tanh %161 : vector<8x32xf32>
    %163 = vector.extract_strided_slice %148 {offsets = [0, 96], sizes = [8, 32], strides = [1, 1]} : vector<8x128xf32> to vector<8x32xf32>
    %164 = arith.negf %163 : vector<8x32xf32>
    %165 = math.exp %164 : vector<8x32xf32>
    %cst_72 = arith.constant 1.000000e+00 : f32
    %166 = vector.broadcast %cst_72 : f32 to vector<8x32xf32>
    %167 = arith.addf %166, %165 : vector<8x32xf32>
    %168 = arith.divf %166, %167 : vector<8x32xf32>
    %169 = arith.mulf %160, %144 : vector<8x32xf32>
    %170 = arith.mulf %154, %162 : vector<8x32xf32>
    %171 = arith.addf %169, %170 : vector<8x32xf32>
    %172 = math.tanh %171 : vector<8x32xf32>
    %173 = arith.mulf %168, %172 : vector<8x32xf32>
    %c0_73 = arith.constant 0 : index
    %c0_74 = arith.constant 0 : index
    %174 = vector.load %arg14[%c0_73, %c0_74] : memref<8x32xf32, #tpu.memory_space<vmem>>, vector<8x32xf32>
    tpu.vector_store %arg14[%c0_73, %c0_74], %173 {strides = array<i32>} : memref<8x32xf32, #tpu.memory_space<vmem>>, vector<8x32xf32>,
    %c0_75 = arith.constant 0 : index
    %c0_76 = arith.constant 0 : index
    %175 = vector.load %arg15[%c0_75, %c0_76] : memref<8x32xf32, #tpu.memory_space<vmem>>, vector<8x32xf32>
    tpu.vector_store %arg15[%c0_75, %c0_76], %171 {strides = array<i32>} : memref<8x32xf32, #tpu.memory_space<vmem>>, vector<8x32xf32>,
    %cst_77 = arith.constant dense<0.000000e+00> : vector<8x1xf32>
    %176 = tpu.matmul %173, %5, %cst_77 {dimension_numbers = #tpu.dot_dimension_numbers<[1], [0], [0], [1], [0, 0, 1, 1], [], []>} : vector<8x32xf32>, vector<32x1xf32>, vector<8x1xf32> -> vector<8x1xf32>
    %177 = vector.broadcast %6 : vector<1x1xf32> to vector<8x1xf32>
    %178 = arith.addf %176, %177 : vector<8x1xf32>
    %179 = arith.negf %178 : vector<8x1xf32>
    %180 = math.exp %179 : vector<8x1xf32>
    %cst_78 = arith.constant 1.000000e+00 : f32
    %181 = vector.broadcast %cst_78 : f32 to vector<8x1xf32>
    %182 = arith.addf %181, %180 : vector<8x1xf32>
    %183 = arith.divf %181, %182 : vector<8x1xf32>
    %184 = arith.index_cast %c2_i32 : i32 to index
    %c0_79 = arith.constant 0 : index
    %c0_80 = arith.constant 0 : index
    %185 = vector.load %arg12[%184, %c0_79, %c0_80] : memref<4x8x1xf32, #tpu.memory_space<vmem>>, vector<1x8x1xf32>
    %186 = vector.shape_cast %185 : vector<1x8x1xf32> to vector<8x1xf32>
    %187 = vector.shape_cast %183 : vector<8x1xf32> to vector<1x8x1xf32>
    tpu.vector_store %arg12[%184, %c0_79, %c0_80], %187 {strides = array<i32>} : memref<4x8x1xf32, #tpu.memory_space<vmem>>, vector<1x8x1xf32>,
    %cst_81 = arith.constant dense<0.000000e+00> : vector<8x16xf32>
    %188 = tpu.matmul %173, %7, %cst_81 {dimension_numbers = #tpu.dot_dimension_numbers<[1], [0], [0], [1], [0, 0, 1, 1], [], []>} : vector<8x32xf32>, vector<32x16xf32>, vector<8x16xf32> -> vector<8x16xf32>
    %189 = vector.broadcast %8 : vector<1x16xf32> to vector<8x16xf32>
    %190 = arith.addf %188, %189 : vector<8x16xf32>
    %cst_82 = arith.constant dense<0xFF800000> : vector<8xf32>
    %191 = vector.multi_reduction <maximumf>, %190, %cst_82 [1] : vector<8x16xf32> to vector<8xf32>
    %192 = vector.shape_cast %191 : vector<8xf32> to vector<8x1xf32>
    %193 = vector.broadcast %192 : vector<8x1xf32> to vector<8x16xf32>
    %194 = arith.subf %190, %193 : vector<8x16xf32>
    %195 = math.exp %194 : vector<8x16xf32>
    %cst_83 = arith.constant dense<0.000000e+00> : vector<8xf32>
    %196 = vector.multi_reduction <add>, %195, %cst_83 [1] : vector<8x16xf32> to vector<8xf32>
    %197 = vector.shape_cast %196 : vector<8xf32> to vector<8x1xf32>
    %198 = vector.broadcast %197 : vector<8x1xf32> to vector<8x16xf32>
    %199 = arith.divf %195, %198 : vector<8x16xf32>
    %200 = arith.index_cast %c2_i32 : i32 to index
    %c0_84 = arith.constant 0 : index
    %c0_85 = arith.constant 0 : index
    %201 = vector.load %arg13[%200, %c0_84, %c0_85] : memref<4x8x16xf32, #tpu.memory_space<vmem>>, vector<1x8x16xf32>
    %202 = vector.shape_cast %201 : vector<1x8x16xf32> to vector<8x16xf32>
    %203 = vector.shape_cast %199 : vector<8x16xf32> to vector<1x8x16xf32>
    tpu.vector_store %arg13[%200, %c0_84, %c0_85], %203 {strides = array<i32>} : memref<4x8x16xf32, #tpu.memory_space<vmem>>, vector<1x8x16xf32>,
    %c3_i32 = arith.constant 3 : i32
    %204 = arith.index_cast %c3_i32 : i32 to index
    %c0_86 = arith.constant 0 : index
    %c0_87 = arith.constant 0 : index
    %205 = vector.load %arg2[%204, %c0_86, %c0_87] : memref<4x8x16xf32, #tpu.memory_space<vmem>>, vector<1x8x16xf32>
    %206 = vector.shape_cast %205 : vector<1x8x16xf32> to vector<8x16xf32>
    %c0_88 = arith.constant 0 : index
    %c0_89 = arith.constant 0 : index
    %207 = vector.load %arg14[%c0_88, %c0_89] : memref<8x32xf32, #tpu.memory_space<vmem>>, vector<8x32xf32>
    %c0_90 = arith.constant 0 : index
    %c0_91 = arith.constant 0 : index
    %208 = vector.load %arg15[%c0_90, %c0_91] : memref<8x32xf32, #tpu.memory_space<vmem>>, vector<8x32xf32>
    %cst_92 = arith.constant dense<0.000000e+00> : vector<8x128xf32>
    %209 = tpu.matmul %206, %3, %cst_92 {dimension_numbers = #tpu.dot_dimension_numbers<[1], [0], [0], [1], [0, 0, 1, 1], [], []>} : vector<8x16xf32>, vector<16x128xf32>, vector<8x128xf32> -> vector<8x128xf32>
    %cst_93 = arith.constant dense<0.000000e+00> : vector<8x128xf32>
    %210 = tpu.matmul %207, %4, %cst_93 {dimension_numbers = #tpu.dot_dimension_numbers<[1], [0], [0], [1], [0, 0, 1, 1], [], []>} : vector<8x32xf32>, vector<32x128xf32>, vector<8x128xf32> -> vector<8x128xf32>
    %211 = arith.addf %209, %210 : vector<8x128xf32>
    %212 = arith.addf %211, %11 : vector<8x128xf32>
    %213 = vector.extract_strided_slice %212 {offsets = [0, 0], sizes = [8, 32], strides = [1, 1]} : vector<8x128xf32> to vector<8x32xf32>
    %214 = arith.negf %213 : vector<8x32xf32>
    %215 = math.exp %214 : vector<8x32xf32>
    %cst_94 = arith.constant 1.000000e+00 : f32
    %216 = vector.broadcast %cst_94 : f32 to vector<8x32xf32>
    %217 = arith.addf %216, %215 : vector<8x32xf32>
    %218 = arith.divf %216, %217 : vector<8x32xf32>
    %219 = vector.extract_strided_slice %212 {offsets = [0, 32], sizes = [8, 32], strides = [1, 1]} : vector<8x128xf32> to vector<8x32xf32>
    %220 = arith.negf %219 : vector<8x32xf32>
    %221 = math.exp %220 : vector<8x32xf32>
    %cst_95 = arith.constant 1.000000e+00 : f32
    %222 = vector.broadcast %cst_95 : f32 to vector<8x32xf32>
    %223 = arith.addf %222, %221 : vector<8x32xf32>
    %224 = arith.divf %222, %223 : vector<8x32xf32>
    %225 = vector.extract_strided_slice %212 {offsets = [0, 64], sizes = [8, 32], strides = [1, 1]} : vector<8x128xf32> to vector<8x32xf32>
    %226 = math.tanh %225 : vector<8x32xf32>
    %227 = vector.extract_strided_slice %212 {offsets = [0, 96], sizes = [8, 32], strides = [1, 1]} : vector<8x128xf32> to vector<8x32xf32>
    %228 = arith.negf %227 : vector<8x32xf32>
    %229 = math.exp %228 : vector<8x32xf32>
    %cst_96 = arith.constant 1.000000e+00 : f32
    %230 = vector.broadcast %cst_96 : f32 to vector<8x32xf32>
    %231 = arith.addf %230, %229 : vector<8x32xf32>
    %232 = arith.divf %230, %231 : vector<8x32xf32>
    %233 = arith.mulf %224, %208 : vector<8x32xf32>
    %234 = arith.mulf %218, %226 : vector<8x32xf32>
    %235 = arith.addf %233, %234 : vector<8x32xf32>
    %236 = math.tanh %235 : vector<8x32xf32>
    %237 = arith.mulf %232, %236 : vector<8x32xf32>
    %c0_97 = arith.constant 0 : index
    %c0_98 = arith.constant 0 : index
    %238 = vector.load %arg14[%c0_97, %c0_98] : memref<8x32xf32, #tpu.memory_space<vmem>>, vector<8x32xf32>
    tpu.vector_store %arg14[%c0_97, %c0_98], %237 {strides = array<i32>} : memref<8x32xf32, #tpu.memory_space<vmem>>, vector<8x32xf32>,
    %c0_99 = arith.constant 0 : index
    %c0_100 = arith.constant 0 : index
    %239 = vector.load %arg15[%c0_99, %c0_100] : memref<8x32xf32, #tpu.memory_space<vmem>>, vector<8x32xf32>
    tpu.vector_store %arg15[%c0_99, %c0_100], %235 {strides = array<i32>} : memref<8x32xf32, #tpu.memory_space<vmem>>, vector<8x32xf32>,
    %cst_101 = arith.constant dense<0.000000e+00> : vector<8x1xf32>
    %240 = tpu.matmul %237, %5, %cst_101 {dimension_numbers = #tpu.dot_dimension_numbers<[1], [0], [0], [1], [0, 0, 1, 1], [], []>} : vector<8x32xf32>, vector<32x1xf32>, vector<8x1xf32> -> vector<8x1xf32>
    %241 = vector.broadcast %6 : vector<1x1xf32> to vector<8x1xf32>
    %242 = arith.addf %240, %241 : vector<8x1xf32>
    %243 = arith.negf %242 : vector<8x1xf32>
    %244 = math.exp %243 : vector<8x1xf32>
    %cst_102 = arith.constant 1.000000e+00 : f32
    %245 = vector.broadcast %cst_102 : f32 to vector<8x1xf32>
    %246 = arith.addf %245, %244 : vector<8x1xf32>
    %247 = arith.divf %245, %246 : vector<8x1xf32>
    %248 = arith.index_cast %c3_i32 : i32 to index
    %c0_103 = arith.constant 0 : index
    %c0_104 = arith.constant 0 : index
    %249 = vector.load %arg12[%248, %c0_103, %c0_104] : memref<4x8x1xf32, #tpu.memory_space<vmem>>, vector<1x8x1xf32>
    %250 = vector.shape_cast %249 : vector<1x8x1xf32> to vector<8x1xf32>
    %251 = vector.shape_cast %247 : vector<8x1xf32> to vector<1x8x1xf32>
    tpu.vector_store %arg12[%248, %c0_103, %c0_104], %251 {strides = array<i32>} : memref<4x8x1xf32, #tpu.memory_space<vmem>>, vector<1x8x1xf32>,
    %cst_105 = arith.constant dense<0.000000e+00> : vector<8x16xf32>
    %252 = tpu.matmul %237, %7, %cst_105 {dimension_numbers = #tpu.dot_dimension_numbers<[1], [0], [0], [1], [0, 0, 1, 1], [], []>} : vector<8x32xf32>, vector<32x16xf32>, vector<8x16xf32> -> vector<8x16xf32>
    %253 = vector.broadcast %8 : vector<1x16xf32> to vector<8x16xf32>
    %254 = arith.addf %252, %253 : vector<8x16xf32>
    %cst_106 = arith.constant dense<0xFF800000> : vector<8xf32>
    %255 = vector.multi_reduction <maximumf>, %254, %cst_106 [1] : vector<8x16xf32> to vector<8xf32>
    %256 = vector.shape_cast %255 : vector<8xf32> to vector<8x1xf32>
    %257 = vector.broadcast %256 : vector<8x1xf32> to vector<8x16xf32>
    %258 = arith.subf %254, %257 : vector<8x16xf32>
    %259 = math.exp %258 : vector<8x16xf32>
    %cst_107 = arith.constant dense<0.000000e+00> : vector<8xf32>
    %260 = vector.multi_reduction <add>, %259, %cst_107 [1] : vector<8x16xf32> to vector<8xf32>
    %261 = vector.shape_cast %260 : vector<8xf32> to vector<8x1xf32>
    %262 = vector.broadcast %261 : vector<8x1xf32> to vector<8x16xf32>
    %263 = arith.divf %259, %262 : vector<8x16xf32>
    %264 = arith.index_cast %c3_i32 : i32 to index
    %c0_108 = arith.constant 0 : index
    %c0_109 = arith.constant 0 : index
    %265 = vector.load %arg13[%264, %c0_108, %c0_109] : memref<4x8x16xf32, #tpu.memory_space<vmem>>, vector<1x8x16xf32>
    %266 = vector.shape_cast %265 : vector<1x8x16xf32> to vector<8x16xf32>
    %267 = vector.shape_cast %263 : vector<8x16xf32> to vector<1x8x16xf32>
    tpu.vector_store %arg13[%264, %c0_108, %c0_109], %267 {strides = array<i32>} : memref<4x8x16xf32, #tpu.memory_space<vmem>>, vector<1x8x16xf32>,
    %c4_i32 = arith.constant 4 : i32
    return
  }
  func.func @transform_0(%arg0: i32, %arg1: i32) -> (i32, i32, i32) {
    %c0_i32 = arith.constant 0 : i32
    %c0_i32_0 = arith.constant 0 : i32
    return %arg1, %arg0, %c0_i32 : i32, i32, i32
  }
  func.func @transform_1(%arg0: i32, %arg1: i32) -> (i32, i32, i32) {
    %c0_i32 = arith.constant 0 : i32
    %c0_i32_0 = arith.constant 0 : i32
    %c0_i32_1 = arith.constant 0 : i32
    return %c0_i32, %arg0, %c0_i32_0 : i32, i32, i32
  }
  func.func @transform_2(%arg0: i32, %arg1: i32) -> (i32, i32, i32) {
    %c0_i32 = arith.constant 0 : i32
    %c0_i32_0 = arith.constant 0 : i32
    %c0_i32_1 = arith.constant 0 : i32
    return %c0_i32, %arg0, %c0_i32_0 : i32, i32, i32
  }
  func.func @transform_3(%arg0: i32, %arg1: i32) -> (i32, i32) {
    %c0_i32 = arith.constant 0 : i32
    %c0_i32_0 = arith.constant 0 : i32
    %c0_i32_1 = arith.constant 0 : i32
    return %c0_i32, %c0_i32_0 : i32, i32
  }
  func.func @transform_4(%arg0: i32, %arg1: i32) -> (i32, i32) {
    %c0_i32 = arith.constant 0 : i32
    %c0_i32_0 = arith.constant 0 : i32
    %c0_i32_1 = arith.constant 0 : i32
    return %c0_i32, %c0_i32_0 : i32, i32
  }
  func.func @transform_5(%arg0: i32, %arg1: i32) -> (i32, i32) {
    %c0_i32 = arith.constant 0 : i32
    %c0_i32_0 = arith.constant 0 : i32
    %c0_i32_1 = arith.constant 0 : i32
    return %c0_i32, %c0_i32_0 : i32, i32
  }
  func.func @transform_6(%arg0: i32, %arg1: i32) -> (i32, i32) {
    %c0_i32 = arith.constant 0 : i32
    %c0_i32_0 = arith.constant 0 : i32
    %c0_i32_1 = arith.constant 0 : i32
    return %c0_i32, %c0_i32_0 : i32, i32
  }
  func.func @transform_7(%arg0: i32, %arg1: i32) -> (i32, i32) {
    %c0_i32 = arith.constant 0 : i32
    %c0_i32_0 = arith.constant 0 : i32
    %c0_i32_1 = arith.constant 0 : i32
    return %c0_i32, %c0_i32_0 : i32, i32
  }
  func.func @transform_8(%arg0: i32, %arg1: i32) -> (i32, i32) {
    %c0_i32 = arith.constant 0 : i32
    %c0_i32_0 = arith.constant 0 : i32
    %c0_i32_1 = arith.constant 0 : i32
    return %c0_i32, %c0_i32_0 : i32, i32
  }
  func.func @transform_9(%arg0: i32, %arg1: i32) -> (i32, i32) {
    %c0_i32 = arith.constant 0 : i32
    %c0_i32_0 = arith.constant 0 : i32
    %c0_i32_1 = arith.constant 0 : i32
    return %c0_i32, %c0_i32_0 : i32, i32
  }
  func.func @transform_10(%arg0: i32, %arg1: i32) -> (i32, i32, i32) {
    %c0_i32 = arith.constant 0 : i32
    %c0_i32_0 = arith.constant 0 : i32
    return %arg1, %arg0, %c0_i32 : i32, i32, i32
  }
  func.func @transform_11(%arg0: i32, %arg1: i32) -> (i32, i32, i32) {
    %c0_i32 = arith.constant 0 : i32
    %c0_i32_0 = arith.constant 0 : i32
    return %arg1, %arg0, %c0_i32 : i32, i32, i32
  }
}

</mosaic_0001>

<llo_original>
// kernel: tpu_custom_call.1
$region0: #{tpu_custom_call.1}
  #allocation0 [shape = 'u32[]', space=smem, size = 0x4, offset = 0x4, fixed_abs, tag = 'smem constant byte address 0x4 - core index']
  #allocation1 [shape = 'u32[144,128]{1,0:T(1,128)}', space=vmem, size = 0x12000, scoped, tag = 'internal scratch']
  #allocation2 [shape = 'f32[8,32]{1,0:T(8,128)}', space=vmem, size = 0x1000, scoped, tag = 'scratch operand']
  #allocation3 [shape = 'f32[8,32]{1,0:T(8,128)}', space=vmem, size = 0x1000, scoped, tag = 'scratch operand']
  #allocation4 [shape = 'f32[1,1]{1,0:T(1,128)S(1)}', space=vmem, size = 0x200, scoped, tag = 'scoped memory for tpu_custom_call.1']
  %s0 = inlined_call_operand.hbm [shape: f32[8,16,16], index: 0, kind: input, shape index: {}]
  %s1 = inlined_call_operand.vmem [shape: f32[1,16,32], index: 1, kind: input, shape index: {}]
  %s2 = inlined_call_operand.vmem [shape: f32[1,16,32], index: 2, kind: input, shape index: {}]
  %s3 = inlined_call_operand.vmem [shape: f32[16,128], index: 3, kind: input, shape index: {}]
  %s4 = inlined_call_operand.vmem [shape: f32[32,128], index: 4, kind: input, shape index: {}]
  %s5 = inlined_call_operand.vmem [shape: f32[1,128], index: 5, kind: input, shape index: {}]
  %s6 = inlined_call_operand.vmem [shape: f32[32,1], index: 6, kind: input, shape index: {}]
  %s7 = inlined_call_operand.<no memory space> [shape: f32[1,1], index: 7, kind: input, shape index: {}]
  %s8 = inlined_call_operand.vmem [shape: f32[32,16], index: 8, kind: input, shape index: {}]
  %s9 = inlined_call_operand.vmem [shape: f32[1,16], index: 9, kind: input, shape index: {}]
  %s10 = inlined_call_operand.vmem [shape: f32[8,16,1], index: 10, kind: output, shape index: {0}]
  %s11 = inlined_call_operand.hbm [shape: f32[8,16,16], index: 11, kind: output, shape index: {1}]
  %12 = xla_tuple %s10, %s11
  %s13 = sld [smem:[#allocation0]]
  $region123: #{tpu_custom_call.1} parent=0
    _
  %s15 = ssub.s32 1, %s13
  %s16 = scalar_select 0, %s15, %s13
  %v17 = vstv %s7
  %18 = vst [vmem:[#allocation4] sm:$0x1] %v17
  $region1: #{tpu_custom_call.1} parent=0
    #allocation5 [shape = 'u8[32768]{0}', space=vmem, size = 0x8000, scoped, tag = 'input window, operand 0']
    #allocation6 [shape = 's32[2]{0}', space=sflag, size = 0x8, scoped, tag = 'scoped memory for tpu_custom_call.1']
    #allocation7 [shape = 's32[2]{0}', space=sflag, size = 0x8, scoped, tag = 'scoped memory for tpu_custom_call.1']
    #allocation8 [shape = 'u8[32768]{0}', space=vmem, size = 0x8000, scoped, tag = 'output window, operand 0']
    #allocation9 [shape = 'u8[32768]{0}', space=vmem, size = 0x8000, scoped, tag = 'output window, operand 1']
    %19 = vsyncpa [#allocation6], 0
    %s20 = scalar_lea.sflag [#allocation6], 1
    %21 = vsyncpa %s20, 0
    %22 = vsyncpa [#allocation7], 0
    %s23 = scalar_lea.sflag [#allocation7], 1
    %24 = vsyncpa %s23, 0
    loop: start=0, step=1, limit=6
    $region2: #{tpu_custom_call.1} parent=1 // loop_pre_header
      _
    $region3: #{tpu_custom_call.1} parent=1 // loop_header
      %s26 = sphi 0, %s30
      %p27 = scmp.ge.s32.totalorder %s26, 6
      %s33 = sphi 0, %s45
      %s34 = sphi 0, %s41
      %s35 = sphi 0, %s33
      %s36 = sphi 0, %s34
      %s37 = sphi 0, %s35
      %s38 = sphi 0, %s36
      %s50 = sphi 0, %s52
      %s53 = sphi 0, %s50
      %s54 = sphi 0, %s53
      %s70 = sphi 0, %s54
      %s76 = sphi 0, %s78
      %s79 = sphi 0, %s76
      %s80 = sphi 0, %s79
      %s96 = sphi 0, %s80
      %s102 = sphi 0, %s104
      %s105 = sphi 0, %s102
      %s106 = sphi 0, %s105
      %s122 = sphi 0, %s106
      %s126 = sphi 0, %s126
      %s128 = sphi 0, %s126
      %s129 = sphi 0, %s128
      %s143 = sphi 0, %s129
      %s147 = sphi 0, %s147
      %s149 = sphi 0, %s147
      %s150 = sphi 0, %s149
      %s164 = sphi 0, %s150
      %s168 = sphi 0, %s168
      %s170 = sphi 0, %s168
      %s171 = sphi 0, %s170
      %s185 = sphi 0, %s171
      %s189 = sphi 0, %s189
      %s191 = sphi 0, %s189
      %s192 = sphi 0, %s191
      %s206 = sphi 0, %s192
      %s210 = sphi 0, %s210
      %s212 = sphi 0, %s210
      %s213 = sphi 0, %s212
      %s227 = sphi 0, %s213
      %s231 = sphi 0, %s231
      %s233 = sphi 0, %s231
      %s234 = sphi 0, %s233
      %s248 = sphi 0, %s234
      %s252 = sphi 0, %s252
      %s254 = sphi 0, %s252
      %s255 = sphi 0, %s254
      %s269 = sphi 0, %s255
      %s277 = sphi 0, %s279
      %s280 = sphi 0, %s277
      %s281 = sphi 0, %s280
      %s297 = sphi 0, %s281
      %s305 = sphi 0, %s307
      %s308 = sphi 0, %s305
      %s309 = sphi 0, %s308
      %s325 = sphi 0, %s309
    $region4: #{tpu_custom_call.1} parent=1 // loop_header_branch
      %29 = sbr.rel (%p27) target = $region8
    $region5: #{tpu_custom_call.1} parent=1 // loop_body
      %s31 = ssub.s32 %s26, 1
      %s32 = ssub.s32 %s26, 2
      %s39 = sadd.s32 1, %s34
      %p40 = scmp.ge.s32.totalorder %s39, 2
      %s41 = scalar_select %p40, 0, %s39
      %s42 = sadd.s32 1, %s33
      %s43 = scalar_select %p40, %s42, %s33
      %p44 = scmp.ge.s32.totalorder %s43, 2
      %s45 = scalar_select %p44, 0, %s43
      %s46 = ssub.s32 %s34, %s41
      %s47 = ssub.s32 %s33, %s45
      %s48 = sor.u32 %s46, %s47
      %p49 = scmp.eq.s32.totalorder %s48, 0
      %s51 = sadd.s32 %s50, 1
      %s52 = scalar_select %p49, %s50, %s51
      %p55 = pneg %p49
      %p56 = scmp.eq.s32.totalorder %s26, 3
      %p57 = por %p55, %p56
      %p58 = scmp.ne.s32.totalorder %s50, %s53
      %p59 = scmp.eq.s32.totalorder %s26, 0
      %p60 = por %p58, %p59
      %p61 = scmp.ne.s32.totalorder %s50, %s53
      %p62 = scmp.eq.s32.totalorder %s31, 3
      %p63 = por %p61, %p62
      %p64 = scmp.ne.s32.totalorder %s53, %s54
      %p65 = scmp.eq.s32.totalorder %s31, 0
      %p66 = por %p64, %p65
      %p67 = scmp.ne.s32.totalorder %s53, %s54
      %p68 = scmp.eq.s32.totalorder %s32, 3
      %p69 = por %p67, %p68
      %p71 = scmp.ne.s32.totalorder %s54, %s70
      %p72 = scmp.eq.s32.totalorder %s32, 0
      %p73 = por %p71, %p72
      %s74 = ssub.s32 %s33, %s45
      %p75 = scmp.eq.s32.totalorder %s74, 0
      %s77 = sadd.s32 %s76, 1
      %s78 = scalar_select %p75, %s76, %s77
      %p81 = pneg %p75
      %p82 = scmp.eq.s32.totalorder %s26, 3
      %p83 = por %p81, %p82
      %p84 = scmp.ne.s32.totalorder %s76, %s79
      %p85 = scmp.eq.s32.totalorder %s26, 0
      %p86 = por %p84, %p85
      %p87 = scmp.ne.s32.totalorder %s76, %s79
      %p88 = scmp.eq.s32.totalorder %s31, 3
      %p89 = por %p87, %p88
      %p90 = scmp.ne.s32.totalorder %s79, %s80
      %p91 = scmp.eq.s32.totalorder %s31, 0
      %p92 = por %p90, %p91
      %p93 = scmp.ne.s32.totalorder %s79, %s80
      %p94 = scmp.eq.s32.totalorder %s32, 3
      %p95 = por %p93, %p94
      %p97 = scmp.ne.s32.totalorder %s80, %s96
      %p98 = scmp.eq.s32.totalorder %s32, 0
      %p99 = por %p97, %p98
      %s100 = ssub.s32 %s33, %s45
      %p101 = scmp.eq.s32.totalorder %s100, 0
      %s103 = sadd.s32 %s102, 1
      %s104 = scalar_select %p101, %s102, %s103
      %p107 = pneg %p101
      %p108 = scmp.eq.s32.totalorder %s26, 3
      %p109 = por %p107, %p108
      %p110 = scmp.ne.s32.totalorder %s102, %s105
      %p111 = scmp.eq.s32.totalorder %s26, 0
      %p112 = por %p110, %p111
      %p113 = scmp.ne.s32.totalorder %s102, %s105
      %p114 = scmp.eq.s32.totalorder %s31, 3
      %p115 = por %p113, %p114
      %p116 = scmp.ne.s32.totalorder %s105, %s106
      %p117 = scmp.eq.s32.totalorder %s31, 0
      %p118 = por %p116, %p117
      %p119 = scmp.ne.s32.totalorder %s105, %s106
      %p120 = scmp.eq.s32.totalorder %s32, 3
      %p121 = por %p119, %p120
      %p123 = scmp.ne.s32.totalorder %s106, %s122
      %p124 = scmp.eq.s32.totalorder %s32, 0
      %p125 = por %p123, %p124
      %s127 = sadd.s32 %s126, 1
      %p130 = scmp.eq.s32.totalorder %s26, 3
      %p131 = scmp.ne.s32.totalorder %s126, %s128
      %p132 = scmp.eq.s32.totalorder %s26, 0
      %p133 = por %p131, %p132
      %p134 = scmp.ne.s32.totalorder %s126, %s128
      %p135 = scmp.eq.s32.totalorder %s31, 3
      %p136 = por %p134, %p135
      %p137 = scmp.ne.s32.totalorder %s128, %s129
      %p138 = scmp.eq.s32.totalorder %s31, 0
      %p139 = por %p137, %p138
      %p140 = scmp.ne.s32.totalorder %s128, %s129
      %p141 = scmp.eq.s32.totalorder %s32, 3
      %p142 = por %p140, %p141
      %p144 = scmp.ne.s32.totalorder %s129, %s143
      %p145 = scmp.eq.s32.totalorder %s32, 0
      %p146 = por %p144, %p145
      %s148 = sadd.s32 %s147, 1
      %p151 = scmp.eq.s32.totalorder %s26, 3
      %p152 = scmp.ne.s32.totalorder %s147, %s149
      %p153 = scmp.eq.s32.totalorder %s26, 0
      %p154 = por %p152, %p153
      %p155 = scmp.ne.s32.totalorder %s147, %s149
      %p156 = scmp.eq.s32.totalorder %s31, 3
      %p157 = por %p155, %p156
      %p158 = scmp.ne.s32.totalorder %s149, %s150
      %p159 = scmp.eq.s32.totalorder %s31, 0
      %p160 = por %p158, %p159
      %p161 = scmp.ne.s32.totalorder %s149, %s150
      %p162 = scmp.eq.s32.totalorder %s32, 3
      %p163 = por %p161, %p162
      %p165 = scmp.ne.s32.totalorder %s150, %s164
      %p166 = scmp.eq.s32.totalorder %s32, 0
      %p167 = por %p165, %p166
      %s169 = sadd.s32 %s168, 1
      %p172 = scmp.eq.s32.totalorder %s26, 3
      %p173 = scmp.ne.s32.totalorder %s168, %s170
      %p174 = scmp.eq.s32.totalorder %s26, 0
      %p175 = por %p173, %p174
      %p176 = scmp.ne.s32.totalorder %s168, %s170
      %p177 = scmp.eq.s32.totalorder %s31, 3
      %p178 = por %p176, %p177
      %p179 = scmp.ne.s32.totalorder %s170, %s171
      %p180 = scmp.eq.s32.totalorder %s31, 0
      %p181 = por %p179, %p180
      %p182 = scmp.ne.s32.totalorder %s170, %s171
      %p183 = scmp.eq.s32.totalorder %s32, 3
      %p184 = por %p182, %p183
      %p186 = scmp.ne.s32.totalorder %s171, %s185
      %p187 = scmp.eq.s32.totalorder %s32, 0
      %p188 = por %p186, %p187
      %s190 = sadd.s32 %s189, 1
      %p193 = scmp.eq.s32.totalorder %s26, 3
      %p194 = scmp.ne.s32.totalorder %s189, %s191
      %p195 = scmp.eq.s32.totalorder %s26, 0
      %p196 = por %p194, %p195
      %p197 = scmp.ne.s32.totalorder %s189, %s191
      %p198 = scmp.eq.s32.totalorder %s31, 3
      %p199 = por %p197, %p198
      %p200 = scmp.ne.s32.totalorder %s191, %s192
      %p201 = scmp.eq.s32.totalorder %s31, 0
      %p202 = por %p200, %p201
      %p203 = scmp.ne.s32.totalorder %s191, %s192
      %p204 = scmp.eq.s32.totalorder %s32, 3
      %p205 = por %p203, %p204
      %p207 = scmp.ne.s32.totalorder %s192, %s206
      %p208 = scmp.eq.s32.totalorder %s32, 0
      %p209 = por %p207, %p208
      %s211 = sadd.s32 %s210, 1
      %p214 = scmp.eq.s32.totalorder %s26, 3
      %p215 = scmp.ne.s32.totalorder %s210, %s212
      %p216 = scmp.eq.s32.totalorder %s26, 0
      %p217 = por %p215, %p216
      %p218 = scmp.ne.s32.totalorder %s210, %s212
      %p219 = scmp.eq.s32.totalorder %s31, 3
      %p220 = por %p218, %p219
      %p221 = scmp.ne.s32.totalorder %s212, %s213
      %p222 = scmp.eq.s32.totalorder %s31, 0
      %p223 = por %p221, %p222
      %p224 = scmp.ne.s32.totalorder %s212, %s213
      %p225 = scmp.eq.s32.totalorder %s32, 3
      %p226 = por %p224, %p225
      %p228 = scmp.ne.s32.totalorder %s213, %s227
      %p229 = scmp.eq.s32.totalorder %s32, 0
      %p230 = por %p228, %p229
      %s232 = sadd.s32 %s231, 1
      %p235 = scmp.eq.s32.totalorder %s26, 3
      %p236 = scmp.ne.s32.totalorder %s231, %s233
      %p237 = scmp.eq.s32.totalorder %s26, 0
      %p238 = por %p236, %p237
      %p239 = scmp.ne.s32.totalorder %s231, %s233
      %p240 = scmp.eq.s32.totalorder %s31, 3
      %p241 = por %p239, %p240
      %p242 = scmp.ne.s32.totalorder %s233, %s234
      %p243 = scmp.eq.s32.totalorder %s31, 0
      %p244 = por %p242, %p243
      %p245 = scmp.ne.s32.totalorder %s233, %s234
      %p246 = scmp.eq.s32.totalorder %s32, 3
      %p247 = por %p245, %p246
      %p249 = scmp.ne.s32.totalorder %s234, %s248
      %p250 = scmp.eq.s32.totalorder %s32, 0
      %p251 = por %p249, %p250
      %s253 = sadd.s32 %s252, 1
      %p256 = scmp.eq.s32.totalorder %s26, 3
      %p257 = scmp.ne.s32.totalorder %s252, %s254
      %p258 = scmp.eq.s32.totalorder %s26, 0
      %p259 = por %p257, %p258
      %p260 = scmp.ne.s32.totalorder %s252, %s254
      %p261 = scmp.eq.s32.totalorder %s31, 3
      %p262 = por %p260, %p261
      %p263 = scmp.ne.s32.totalorder %s254, %s255
      %p264 = scmp.eq.s32.totalorder %s31, 0
      %p265 = por %p263, %p264
      %p266 = scmp.ne.s32.totalorder %s254, %s255
      %p267 = scmp.eq.s32.totalorder %s32, 3
      %p268 = por %p266, %p267
      %p270 = scmp.ne.s32.totalorder %s255, %s269
      %p271 = scmp.eq.s32.totalorder %s32, 0
      %p272 = por %p270, %p271
      %s273 = ssub.s32 %s34, %s41
      %s274 = ssub.s32 %s33, %s45
      %s275 = sor.u32 %s273, %s274
      %p276 = scmp.eq.s32.totalorder %s275, 0
      %s278 = sadd.s32 %s277, 1
      %s279 = scalar_select %p276, %s277, %s278
      %p282 = pneg %p276
      %p283 = scmp.eq.s32.totalorder %s26, 3
      %p284 = por %p282, %p283
      %p285 = scmp.ne.s32.totalorder %s277, %s280
      %p286 = scmp.eq.s32.totalorder %s26, 0
      %p287 = por %p285, %p286
      %p288 = scmp.ne.s32.totalorder %s277, %s280
      %p289 = scmp.eq.s32.totalorder %s31, 3
      %p290 = por %p288, %p289
      %p291 = scmp.ne.s32.totalorder %s280, %s281
      %p292 = scmp.eq.s32.totalorder %s31, 0
      %p293 = por %p291, %p292
      %p294 = scmp.ne.s32.totalorder %s280, %s281
      %p295 = scmp.eq.s32.totalorder %s32, 3
      %p296 = por %p294, %p295
      %p298 = scmp.ne.s32.totalorder %s281, %s297
      %p299 = scmp.eq.s32.totalorder %s32, 0
      %p300 = por %p298, %p299
      %s301 = ssub.s32 %s34, %s41
      %s302 = ssub.s32 %s33, %s45
      %s303 = sor.u32 %s301, %s302
      %p304 = scmp.eq.s32.totalorder %s303, 0
      %s306 = sadd.s32 %s305, 1
      %s307 = scalar_select %p304, %s305, %s306
      %p310 = pneg %p304
      %p311 = scmp.eq.s32.totalorder %s26, 3
      %p312 = por %p310, %p311
      %p313 = scmp.ne.s32.totalorder %s305, %s308
      %p314 = scmp.eq.s32.totalorder %s26, 0
      %p315 = por %p313, %p314
      %p316 = scmp.ne.s32.totalorder %s305, %s308
      %p317 = scmp.eq.s32.totalorder %s31, 3
      %p318 = por %p316, %p317
      %p319 = scmp.ne.s32.totalorder %s308, %s309
      %p320 = scmp.eq.s32.totalorder %s31, 0
      %p321 = por %p319, %p320
      %p322 = scmp.ne.s32.totalorder %s308, %s309
      %p323 = scmp.eq.s32.totalorder %s32, 3
      %p324 = por %p322, %p323
      %p326 = scmp.ne.s32.totalorder %s309, %s325
      %p327 = scmp.eq.s32.totalorder %s32, 0
      %p328 = por %p326, %p327
      %p329 = scmp.le.s32.totalorder 1, %s26
      %p330 = scmp.lt.s32.totalorder %s26, 5
      %p331 = pnand %p329, %p330
      %p332 = pneg %p331
      // Predicated region
      $region9: #{tpu_custom_call.1} parent=5 // pred_check
        _
      $region10: #{tpu_custom_call.1} parent=5 // pred_check_branch
        %334 = sbr.rel (%p331) target = $region12
      $region11: #{tpu_custom_call.1} parent=5 // pred_region
        %s335 = ssub.s32 %s26, 1
        // Predicated region
        $region13: #{tpu_custom_call.1} parent=11 // pred_check
          %p336 = pneg %p139
        $region14: #{tpu_custom_call.1} parent=11 // pred_check_branch
          %338 = sbr.rel (%p336) target = $region16
        $region15: #{tpu_custom_call.1} parent=11 // pred_region
          _
        $region16: #{tpu_custom_call.1} parent=11 // pred_fallthru
          _
        // Predicated region
        $region17: #{tpu_custom_call.1} parent=11 // pred_check
          %p339 = pneg %p160
        $region18: #{tpu_custom_call.1} parent=11 // pred_check_branch
          %341 = sbr.rel (%p339) target = $region20
        $region19: #{tpu_custom_call.1} parent=11 // pred_region
          _
        $region20: #{tpu_custom_call.1} parent=11 // pred_fallthru
          _
        // Predicated region
        $region21: #{tpu_custom_call.1} parent=11 // pred_check
          %p342 = pneg %p181
        $region22: #{tpu_custom_call.1} parent=11 // pred_check_branch
          %344 = sbr.rel (%p342) target = $region24
        $region23: #{tpu_custom_call.1} parent=11 // pred_region
          _
        $region24: #{tpu_custom_call.1} parent=11 // pred_fallthru
          _
        // Predicated region
        $region25: #{tpu_custom_call.1} parent=11 // pred_check
          %p345 = pneg %p202
        $region26: #{tpu_custom_call.1} parent=11 // pred_check_branch
          %347 = sbr.rel (%p345) target = $region28
        $region27: #{tpu_custom_call.1} parent=11 // pred_region
          _
        $region28: #{tpu_custom_call.1} parent=11 // pred_fallthru
          _
        // Predicated region
        $region29: #{tpu_custom_call.1} parent=11 // pred_check
          %p348 = pneg %p223
        $region30: #{tpu_custom_call.1} parent=11 // pred_check_branch
          %350 = sbr.rel (%p348) target = $region32
        $region31: #{tpu_custom_call.1} parent=11 // pred_region
          _
        $region32: #{tpu_custom_call.1} parent=11 // pred_fallthru
          _
        // Predicated region
        $region33: #{tpu_custom_call.1} parent=11 // pred_check
          %p351 = pneg %p244
        $region34: #{tpu_custom_call.1} parent=11 // pred_check_branch
          %353 = sbr.rel (%p351) target = $region36
        $region35: #{tpu_custom_call.1} parent=11 // pred_region
          _
        $region36: #{tpu_custom_call.1} parent=11 // pred_fallthru
          _
        // Predicated region
        $region37: #{tpu_custom_call.1} parent=11 // pred_check
          %p354 = pneg %p265
        $region38: #{tpu_custom_call.1} parent=11 // pred_check_branch
          %356 = sbr.rel (%p354) target = $region40
        $region39: #{tpu_custom_call.1} parent=11 // pred_region
          _
        $region40: #{tpu_custom_call.1} parent=11 // pred_fallthru
          _
      $region12: #{tpu_custom_call.1} parent=5 // pred_fallthru
        _
      %p357 = scmp.lt.s32.totalorder %s26, 4
      // Predicated region
      $region41: #{tpu_custom_call.1} parent=5 // pred_check
        %p358 = pneg %p357
      $region42: #{tpu_custom_call.1} parent=5 // pred_check_branch
        %360 = sbr.rel (%p358) target = $region44
      $region43: #{tpu_custom_call.1} parent=5 // pred_region
        // Predicated region
        $region45: #{tpu_custom_call.1} parent=43 // pred_check
          %p361 = pneg %p60
        $region46: #{tpu_custom_call.1} parent=43 // pred_check_branch
          %363 = sbr.rel (%p361) target = $region48
        $region47: #{tpu_custom_call.1} parent=43 // pred_region
          %s364 = sand.u32 %s50, 1
          %s365 = scalar_lea.sflag [#allocation6], %s364
          %s366 = sand.u32 %s50, 1
          %s367 = smul.addr %s366, 32
          %s368 = scalar_lea.vmem [#allocation5], %s367
          %s369 = smul.u32 4, %s34
          %s371 = ssub.s32 512, 512
          %372 = vsyncadd %s365, %s371
          %s373 = smul.addr %s369, 2
          %s374 = sadd.s32 %s33, %s373
          %s375 = smul.addr %s374, 128
          %s376 = scalar_lea.hbm %s0, %s375
          %s377 = sshll.u32 %s368, 4
          %s378 = int_to_ptr.vmem [resolvable:$true] %s377
          %383 = dma.hbm_to_vmem [thread:$0]  %s376, 512, %s378, %s365, 256, 128, 8
        $region48: #{tpu_custom_call.1} parent=43 // pred_fallthru
          _
        // Predicated region
        $region49: #{tpu_custom_call.1} parent=43 // pred_check
          %p384 = pneg %p86
        $region50: #{tpu_custom_call.1} parent=43 // pred_check_branch
          %386 = sbr.rel (%p384) target = $region52
        $region51: #{tpu_custom_call.1} parent=43 // pred_region
          %p387 = scmp.lt.s32.totalorder %s33, 1
          %s388 = scalar_select %p387, %s33, 1
          %s389 = smul.addr %s388, 8
          %s390 = scalar_lea.vmem %s1, %s389
        $region52: #{tpu_custom_call.1} parent=43 // pred_fallthru
          _
        // Predicated region
        $region53: #{tpu_custom_call.1} parent=43 // pred_check
          %p391 = pneg %p112
        $region54: #{tpu_custom_call.1} parent=43 // pred_check_branch
          %393 = sbr.rel (%p391) target = $region56
        $region55: #{tpu_custom_call.1} parent=43 // pred_region
          %p394 = scmp.lt.s32.totalorder %s33, 1
          %s395 = scalar_select %p394, %s33, 1
          %s396 = smul.addr %s395, 8
          %s397 = scalar_lea.vmem %s2, %s396
        $region56: #{tpu_custom_call.1} parent=43 // pred_fallthru
          _
      $region44: #{tpu_custom_call.1} parent=5 // pred_fallthru
        _
      %p398 = scmp.le.s32.totalorder 1, %s26
      %p399 = scmp.lt.s32.totalorder %s26, 5
      %p400 = pnand %p398, %p399
      %p401 = pneg %p400
      // Predicated region
      $region57: #{tpu_custom_call.1} parent=5 // pred_check
        _
      $region58: #{tpu_custom_call.1} parent=5 // pred_check_branch
        %403 = sbr.rel (%p400) target = $region60
      $region59: #{tpu_custom_call.1} parent=5 // pred_region
        %s404 = ssub.s32 %s26, 1
        %s405 = sand.u32 %s53, 1
        %s406 = scalar_lea.sflag [#allocation6], %s405
        %s407 = sand.u32 %s53, 1
        %s408 = smul.addr %s407, 32
        %s409 = scalar_lea.vmem [#allocation5], %s408
        // Predicated region
        $region61: #{tpu_custom_call.1} parent=59 // pred_check
          %p410 = pneg %p66
        $region62: #{tpu_custom_call.1} parent=59 // pred_check_branch
          %412 = sbr.rel (%p410) target = $region64
        $region63: #{tpu_custom_call.1} parent=59 // pred_region
          %413 = dma.done %s406, 512
        $region64: #{tpu_custom_call.1} parent=59 // pred_fallthru
          _
        %s414 = sand.u32 %s53, 1
        %s415 = scalar_lea.sflag [#allocation6], %s414
        %s416 = sand.u32 %s53, 1
        %s417 = smul.addr %s416, 32
        %s418 = scalar_lea.vmem [#allocation5], %s417
        %p419 = pneg %p66
        %p420 = pneg %p63
        %p421 = scmp.lt.s32.totalorder %s35, 1
        %s422 = scalar_select %p421, %s35, 1
        %s423 = smul.addr %s422, 8
        %s424 = scalar_lea.vmem %s1, %s423
        %p425 = pneg %p92
        %p426 = pneg %p89
        %p427 = scmp.lt.s32.totalorder %s35, 1
        %s428 = scalar_select %p427, %s35, 1
        %s429 = smul.addr %s428, 8
        %s430 = scalar_lea.vmem %s2, %s429
        %p431 = pneg %p118
        %p432 = pneg %p115
        %p433 = pneg %p139
        %p434 = pneg %p136
        %p435 = pneg %p160
        %p436 = pneg %p157
        %p437 = pneg %p181
        %p438 = pneg %p178
        %p439 = pneg %p202
        %p440 = pneg %p199
        %p441 = pneg %p223
        %p442 = pneg %p220
        %p443 = pneg %p244
        %p444 = pneg %p241
        %p445 = pneg %p265
        %p446 = pneg %p262
        %p447 = pneg %p293
        %p448 = pneg %p290
        %s449 = sand.u32 %s280, 1
        %s450 = sand.u32 %s280, 1
        %s451 = smul.addr %s450, 32
        %s452 = scalar_lea.vmem [#allocation8], %s451
        %p453 = pneg %p321
        %p454 = pneg %p318
        %s455 = sand.u32 %s308, 1
        %s456 = scalar_lea.sflag [#allocation7], %s455
        %s457 = sand.u32 %s308, 1
        %s458 = smul.addr %s457, 32
        %s459 = scalar_lea.vmem [#allocation9], %s458
        %s460 = smul.u32 4, %s36
        %p461 = scmp.lt.s32.totalorder %s35, 1
        %s462 = scalar_select %p461, %s35, 1
        %s463 = smul.addr %s462, 8
        %s464 = scalar_lea.vmem %s1, %s463
        %p465 = scmp.lt.s32.totalorder %s35, 1
        %s466 = scalar_select %p465, %s35, 1
        %s467 = smul.addr %s466, 8
        %s468 = scalar_lea.vmem %s2, %s467
        %s469 = smul.u32 4, %s36
        %s470 = smul.u32 4, %s36
        %p471 = scmp.eq.s32.totalorder %s36, 0
        // Predicated region
        $region65: #{tpu_custom_call.1} parent=59 // pred_check
          %p472 = pneg %p471
        $region66: #{tpu_custom_call.1} parent=59 // pred_check_branch
          %474 = sbr.rel (%p472) target = $region68
        $region67: #{tpu_custom_call.1} parent=59 // pred_region
          %v475 = vld [vmem:[%s464] sm:$0xff]
          %vm476 = vcmask 261120
          %477 = vst.msk [vmem:[#allocation2] sm:$0xff] %vm476, %v475
          %v478 = vld [vmem:[%s468] sm:$0xff]
          %479 = vst.msk [vmem:[#allocation3] sm:$0xff] %vm476, %v478
        $region68: #{tpu_custom_call.1} parent=59 // pred_fallthru
          _
        %v480 = vld [vmem:[%s3] sm:$0xff]
        %v481 = vld [vmem:[%s3 + $0x8] sm:$0xff]
        %v482 = vld [vmem:[%s4] sm:$0xff]
        %v483 = vld [vmem:[%s4 + $0x8] sm:$0xff]
        %v484 = vld [vmem:[%s4 + $0x10] sm:$0xff]
        %v485 = vld [vmem:[%s4 + $0x18] sm:$0xff]
        %v486 = vld [vmem:[%s6] sm:$0xff]
        %v487 = vld [vmem:[%s6 + $0x8] sm:$0xff]
        %v488 = vld [vmem:[%s6 + $0x10] sm:$0xff]
        %v489 = vld [vmem:[%s6 + $0x18] sm:$0xff]
        %v490 = vld [vmem:[#allocation4] sm:$0x1]
        %v491 = vld [vmem:[%s8] sm:$0xff]
        %v492 = vld [vmem:[%s8 + $0x8] sm:$0xff]
        %v493 = vld [vmem:[%s8 + $0x10] sm:$0xff]
        %v494 = vld [vmem:[%s8 + $0x18] sm:$0xff]
        %v495 = vld [vmem:[%s9] sm:$0x1]
        %v496 = vld [vmem:[%s5] sm:$0x1]
        %v498 = vlaneseq
        %v499 = vshrl.u32 %v498, 7
        %v500 = vsub.s32 0, %v499
        %v501 = vrot.slane %v496, %v500
        %v503 = vld [vmem:[%s409] sm:$0xff]
        %v504 = vld [vmem:[#allocation2] sm:$0xff]
        %v505 = vld [vmem:[#allocation3] sm:$0xff]
        %vm506 = vcmask 261120
        %v508 = vsel %vm506, %v504, 0
        %510 = vmatprep.subr.mxu0 0.0
        %511 = vmatpush1.msra.mxu0 %v482
        %512 = vmatprep.subr.mxu0 0.0
        %513 = vmatpush1.msra.mxu0 %v483
        %514 = vmatprep.subr.mxu0 0.0
        %515 = vmatpush1.msra.mxu0 %v484
        %516 = vmatprep.subr.mxu0 0.0
        %517 = vmatpush1.msra.mxu0 %v485
        %518 = vmatprep.subr.mxu0 0.0
        %519 = vmatpush1.msra.mxu0 0.0
        %520 = vmatprep.subr.mxu0 0.0
        %521 = vmatpush1.msra.mxu0 0.0
        %522 = vmatprep.subr.mxu0 0.0
        %523 = vmatpush1.msra.mxu0 0.0
        %524 = vmatprep.subr.mxu0 0.0
        %525 = vmatpush1.msra.mxu0 0.0
        %526 = vmatprep.subr.mxu0 0.0
        %527 = vmatpush1.msra.mxu0 0.0
        %528 = vmatprep.subr.mxu0 0.0
        %529 = vmatpush1.msra.mxu0 0.0
        %530 = vmatprep.subr.mxu0 0.0
        %531 = vmatpush1.msra.mxu0 0.0
        %532 = vmatprep.subr.mxu0 0.0
        %533 = vmatpush1.msra.mxu0 0.0
        %534 = vmatprep.subr.mxu0 0.0
        %535 = vmatpush1.msra.mxu0 0.0
        %536 = vmatprep.subr.mxu0 0.0
        %537 = vmatpush1.msra.mxu0 0.0
        %538 = vmatprep.subr.mxu0 0.0
        %539 = vmatpush1.msra.mxu0 0.0
        %540 = vmatprep.subr.mxu0 0.0
        %541 = vmatpush1.msra.mxu0 0.0
        %542 = vmatprep.subr.mxu0 0.0
        %543 = vmatpush1.msra.mxu0 0.0
        %544 = vmatprep.subr.mxu0 0.0
        %545 = vmatpush1.msra.mxu0 0.0
        %546 = vmatprep.subr.mxu0 0.0
        %547 = vmatpush1.msra.mxu0 0.0
        %548 = vmatprep.subr.mxu0 0.0
        %549 = vmatpush1.msra.mxu0 0.0
        %550 = vmatprep.subr.mxu0 0.0
        %551 = vmatpush1.msra.mxu0 0.0
        %552 = vmatprep.subr.mxu0 0.0
        %553 = vmatpush1.msra.mxu0 0.0
        %554 = vmatprep.subr.mxu0 0.0
        %555 = vmatpush1.msra.mxu0 0.0
        %556 = vmatprep.subr.mxu0 0.0
        %557 = vmatpush1.msra.mxu0 0.0
        %558 = vmatprep.subr.mxu0 0.0
        %559 = vmatpush1.msra.mxu0 0.0
        %560 = vmatprep.subr.mxu0 0.0
        %561 = vmatpush1.msra.mxu0 0.0
        %562 = vmatprep.subr.mxu0 0.0
        %563 = vmatpush1.msra.mxu0 0.0
        %564 = vmatprep.subr.mxu0 0.0
        %565 = vmatpush1.msra.mxu0 0.0
        %566 = vmatprep.subr.mxu0 0.0
        %567 = vmatpush1.msra.mxu0 0.0
        %568 = vmatprep.subr.mxu0 0.0
        %569 = vmatpush1.msra.mxu0 0.0
        %570 = vmatprep.subr.mxu0 0.0
        %571 = vmatpush1.msra.mxu0 0.0
        %572 = vmatprep.subr.mxu0 0.0
        %573 = vmatpush1.msra.mxu0 0.0
        %574 = vmatprep.mubr.f32.mxu0 0.0
        %575 = vmatmul.mubr.f32.gmra.mrb[0].mxu0 %v508
        %v576 = vpop.f32.mrb[0].mxu0
        %v577 = vadd.f32 0.0, %v576
        %v578 = vpop.f32.mrb[0].mxu0
        %579 = vdwg.mxu0
        %vm580 = vcmask 130048
        %v582 = vsel %vm580, %v503, 0
        %584 = vmatprep.subr.mxu0 0.0
        %585 = vmatpush1.msra.mxu0 %v480
        %586 = vmatprep.subr.mxu0 0.0
        %587 = vmatpush1.msra.mxu0 %v481
        %588 = vmatprep.subr.mxu0 0.0
        %589 = vmatpush1.msra.mxu0 0.0
        %590 = vmatprep.subr.mxu0 0.0
        %591 = vmatpush1.msra.mxu0 0.0
        %592 = vmatprep.subr.mxu0 0.0
        %593 = vmatpush1.msra.mxu0 0.0
        %594 = vmatprep.subr.mxu0 0.0
        %595 = vmatpush1.msra.mxu0 0.0
        %596 = vmatprep.subr.mxu0 0.0
        %597 = vmatpush1.msra.mxu0 0.0
        %598 = vmatprep.subr.mxu0 0.0
        %599 = vmatpush1.msra.mxu0 0.0
        %600 = vmatprep.subr.mxu0 0.0
        %601 = vmatpush1.msra.mxu0 0.0
        %602 = vmatprep.subr.mxu0 0.0
        %603 = vmatpush1.msra.mxu0 0.0
        %604 = vmatprep.subr.mxu0 0.0
        %605 = vmatpush1.msra.mxu0 0.0
        %606 = vmatprep.subr.mxu0 0.0
        %607 = vmatpush1.msra.mxu0 0.0
        %608 = vmatprep.subr.mxu0 0.0
        %609 = vmatpush1.msra.mxu0 0.0
        %610 = vmatprep.subr.mxu0 0.0
        %611 = vmatpush1.msra.mxu0 0.0
        %612 = vmatprep.subr.mxu0 0.0
        %613 = vmatpush1.msra.mxu0 0.0
        %614 = vmatprep.subr.mxu0 0.0
        %615 = vmatpush1.msra.mxu0 0.0
        %616 = vmatprep.subr.mxu0 0.0
        %617 = vmatpush1.msra.mxu0 0.0
        %618 = vmatprep.subr.mxu0 0.0
        %619 = vmatpush1.msra.mxu0 0.0
        %620 = vmatprep.subr.mxu0 0.0
        %621 = vmatpush1.msra.mxu0 0.0
        %622 = vmatprep.subr.mxu0 0.0
        %623 = vmatpush1.msra.mxu0 0.0
        %624 = vmatprep.subr.mxu0 0.0
        %625 = vmatpush1.msra.mxu0 0.0
        %626 = vmatprep.subr.mxu0 0.0
        %627 = vmatpush1.msra.mxu0 0.0
        %628 = vmatprep.subr.mxu0 0.0
        %629 = vmatpush1.msra.mxu0 0.0
        %630 = vmatprep.subr.mxu0 0.0
        %631 = vmatpush1.msra.mxu0 0.0
        %632 = vmatprep.subr.mxu0 0.0
        %633 = vmatpush1.msra.mxu0 0.0
        %634 = vmatprep.subr.mxu0 0.0
        %635 = vmatpush1.msra.mxu0 0.0
        %636 = vmatprep.subr.mxu0 0.0
        %637 = vmatpush1.msra.mxu0 0.0
        %638 = vmatprep.subr.mxu0 0.0
        %639 = vmatpush1.msra.mxu0 0.0
        %640 = vmatprep.subr.mxu0 0.0
        %641 = vmatpush1.msra.mxu0 0.0
        %642 = vmatprep.subr.mxu0 0.0
        %643 = vmatpush1.msra.mxu0 0.0
        %644 = vmatprep.subr.mxu0 0.0
        %645 = vmatpush1.msra.mxu0 0.0
        %646 = vmatprep.subr.mxu0 0.0
        %647 = vmatpush1.msra.mxu0 0.0
        %648 = vmatprep.mubr.f32.mxu0 0.0
        %649 = vmatmul.mubr.f32.gmra.mrb[0].mxu0 %v582
        %v650 = vpop.f32.mrb[0].mxu0
        %v651 = vadd.f32 %v577, %v650
        %v652 = vpop.f32.mrb[0].mxu0
        %653 = vdwg.mxu0
        %v654 = vadd.f32 %v651, %v501
        %v655 = vxor.u32 %v654, 2147483648
        %v656 = vmul.f32 %v655, 1.442695
        %v657 = vpow.pop %v656
        %v658 = vadd.f32 %v657, 1.0
        %v659 = vrcp.pop %v658
        %v660 = vmul.f32 1.0, %v659
        %v661 = vtanh.pop %v654
        %663 = vrot.lane.b32.xlu0 %v505, 32
        %v664 = vpop.permute.xlu0 %663
        %v666 = vmul.f32 %v660, %v664
        %668 = vrot.lane.b32.xlu0 %v661, 64
        %v669 = vpop.permute.xlu0 %668
        %v671 = vmul.f32 %v660, %v669
        %673 = vrot.lane.b32.xlu0 %v671, 32
        %v674 = vpop.permute.xlu0 %673
        %v676 = vadd.f32 %v666, %v674
        %v677 = vtanh.pop %v676
        %679 = vrot.lane.b32.xlu0 %v677, 64
        %v680 = vpop.permute.xlu0 %679
        %v682 = vmul.f32 %v660, %v680
        %684 = vrot.lane.b32.xlu0 %v682, 32
        %v685 = vpop.permute.xlu0 %684
        %687 = vst.msk [vmem:[#allocation2] sm:$0xff] %vm506, %v685
        %689 = vrot.lane.b32.xlu0 %v676, 96
        %v690 = vpop.permute.xlu0 %689
        %692 = vst.msk [vmem:[#allocation3] sm:$0xff] %vm506, %v690
        %v694 = vlaneseq
        %v695 = vshrl.u32 %v694, 7
        %v696 = vsub.s32 0, %v695
        %v697 = vrot.slane %v490, %v696
        %v699 = vsel %vm506, %v685, 0
        %701 = vmatprep.subr.mxu0 0.0
        %702 = vmatpush1.msra.mxu0 %v486
        %703 = vmatprep.subr.mxu0 0.0
        %704 = vmatpush1.msra.mxu0 %v487
        %705 = vmatprep.subr.mxu0 0.0
        %706 = vmatpush1.msra.mxu0 %v488
        %707 = vmatprep.subr.mxu0 0.0
        %708 = vmatpush1.msra.mxu0 %v489
        %709 = vmatprep.subr.mxu0 0.0
        %710 = vmatpush1.msra.mxu0 0.0
        %711 = vmatprep.subr.mxu0 0.0
        %712 = vmatpush1.msra.mxu0 0.0
        %713 = vmatprep.subr.mxu0 0.0
        %714 = vmatpush1.msra.mxu0 0.0
        %715 = vmatprep.subr.mxu0 0.0
        %716 = vmatpush1.msra.mxu0 0.0
        %717 = vmatprep.subr.mxu0 0.0
        %718 = vmatpush1.msra.mxu0 0.0
        %719 = vmatprep.subr.mxu0 0.0
        %720 = vmatpush1.msra.mxu0 0.0
        %721 = vmatprep.subr.mxu0 0.0
        %722 = vmatpush1.msra.mxu0 0.0
        %723 = vmatprep.subr.mxu0 0.0
        %724 = vmatpush1.msra.mxu0 0.0
        %725 = vmatprep.subr.mxu0 0.0
        %726 = vmatpush1.msra.mxu0 0.0
        %727 = vmatprep.subr.mxu0 0.0
        %728 = vmatpush1.msra.mxu0 0.0
        %729 = vmatprep.subr.mxu0 0.0
        %730 = vmatpush1.msra.mxu0 0.0
        %731 = vmatprep.subr.mxu0 0.0
        %732 = vmatpush1.msra.mxu0 0.0
        %733 = vmatprep.subr.mxu0 0.0
        %734 = vmatpush1.msra.mxu0 0.0
        %735 = vmatprep.subr.mxu0 0.0
        %736 = vmatpush1.msra.mxu0 0.0
        %737 = vmatprep.subr.mxu0 0.0
        %738 = vmatpush1.msra.mxu0 0.0
        %739 = vmatprep.subr.mxu0 0.0
        %740 = vmatpush1.msra.mxu0 0.0
        %741 = vmatprep.subr.mxu0 0.0
        %742 = vmatpush1.msra.mxu0 0.0
        %743 = vmatprep.subr.mxu0 0.0
        %744 = vmatpush1.msra.mxu0 0.0
        %745 = vmatprep.subr.mxu0 0.0
        %746 = vmatpush1.msra.mxu0 0.0
        %747 = vmatprep.subr.mxu0 0.0
        %748 = vmatpush1.msra.mxu0 0.0
        %749 = vmatprep.subr.mxu0 0.0
        %750 = vmatpush1.msra.mxu0 0.0
        %751 = vmatprep.subr.mxu0 0.0
        %752 = vmatpush1.msra.mxu0 0.0
        %753 = vmatprep.subr.mxu0 0.0
        %754 = vmatpush1.msra.mxu0 0.0
        %755 = vmatprep.subr.mxu0 0.0
        %756 = vmatpush1.msra.mxu0 0.0
        %757 = vmatprep.subr.mxu0 0.0
        %758 = vmatpush1.msra.mxu0 0.0
        %759 = vmatprep.subr.mxu0 0.0
        %760 = vmatpush1.msra.mxu0 0.0
        %761 = vmatprep.subr.mxu0 0.0
        %762 = vmatpush1.msra.mxu0 0.0
        %763 = vmatprep.subr.mxu0 0.0
        %764 = vmatpush1.msra.mxu0 0.0
        %765 = vmatprep.mubr.f32.mxu0 0.0
        %766 = vmatmul.mubr.f32.gmra.mrb[0].mxu0 %v699
        %v767 = vpop.f32.mrb[0].mxu0
        %v768 = vadd.f32 %v697, %v767
        %v769 = vpop.f32.mrb[0].mxu0
        %770 = vdwg.mxu0
        %v771 = vxor.u32 %v768, 2147483648
        %v772 = vmul.f32 %v771, 1.442695
        %v773 = vpow.pop %v772
        %v774 = vadd.f32 %v773, 1.0
        %v775 = vrcp.pop %v774
        %v776 = vmul.f32 1.0, %v775
        %vm777 = vcmask 7168
        %778 = vst.msk [vmem:[%s452] sm:$0xff] %vm777, %v776
        %v780 = vlaneseq
        %v781 = vshrl.u32 %v780, 7
        %v782 = vsub.s32 0, %v781
        %v783 = vrot.slane %v495, %v782
        %785 = vmatprep.subr.mxu0 0.0
        %786 = vmatpush1.msra.mxu0 %v491
        %787 = vmatprep.subr.mxu0 0.0
        %788 = vmatpush1.msra.mxu0 %v492
        %789 = vmatprep.subr.mxu0 0.0
        %790 = vmatpush1.msra.mxu0 %v493
        %791 = vmatprep.subr.mxu0 0.0
        %792 = vmatpush1.msra.mxu0 %v494
        %793 = vmatprep.subr.mxu0 0.0
        %794 = vmatpush1.msra.mxu0 0.0
        %795 = vmatprep.subr.mxu0 0.0
        %796 = vmatpush1.msra.mxu0 0.0
        %797 = vmatprep.subr.mxu0 0.0
        %798 = vmatpush1.msra.mxu0 0.0
        %799 = vmatprep.subr.mxu0 0.0
        %800 = vmatpush1.msra.mxu0 0.0
        %801 = vmatprep.subr.mxu0 0.0
        %802 = vmatpush1.msra.mxu0 0.0
        %803 = vmatprep.subr.mxu0 0.0
        %804 = vmatpush1.msra.mxu0 0.0
        %805 = vmatprep.subr.mxu0 0.0
        %806 = vmatpush1.msra.mxu0 0.0
        %807 = vmatprep.subr.mxu0 0.0
        %808 = vmatpush1.msra.mxu0 0.0
        %809 = vmatprep.subr.mxu0 0.0
        %810 = vmatpush1.msra.mxu0 0.0
        %811 = vmatprep.subr.mxu0 0.0
        %812 = vmatpush1.msra.mxu0 0.0
        %813 = vmatprep.subr.mxu0 0.0
        %814 = vmatpush1.msra.mxu0 0.0
        %815 = vmatprep.subr.mxu0 0.0
        %816 = vmatpush1.msra.mxu0 0.0
        %817 = vmatprep.subr.mxu0 0.0
        %818 = vmatpush1.msra.mxu0 0.0
        %819 = vmatprep.subr.mxu0 0.0
        %820 = vmatpush1.msra.mxu0 0.0
        %821 = vmatprep.subr.mxu0 0.0
        %822 = vmatpush1.msra.mxu0 0.0
        %823 = vmatprep.subr.mxu0 0.0
        %824 = vmatpush1.msra.mxu0 0.0
        %825 = vmatprep.subr.mxu0 0.0
        %826 = vmatpush1.msra.mxu0 0.0
        %827 = vmatprep.subr.mxu0 0.0
        %828 = vmatpush1.msra.mxu0 0.0
        %829 = vmatprep.subr.mxu0 0.0
        %830 = vmatpush1.msra.mxu0 0.0
        %831 = vmatprep.subr.mxu0 0.0
        %832 = vmatpush1.msra.mxu0 0.0
        %833 = vmatprep.subr.mxu0 0.0
        %834 = vmatpush1.msra.mxu0 0.0
        %835 = vmatprep.subr.mxu0 0.0
        %836 = vmatpush1.msra.mxu0 0.0
        %837 = vmatprep.subr.mxu0 0.0
        %838 = vmatpush1.msra.mxu0 0.0
        %839 = vmatprep.subr.mxu0 0.0
        %840 = vmatpush1.msra.mxu0 0.0
        %841 = vmatprep.subr.mxu0 0.0
        %842 = vmatpush1.msra.mxu0 0.0
        %843 = vmatprep.subr.mxu0 0.0
        %844 = vmatpush1.msra.mxu0 0.0
        %845 = vmatprep.subr.mxu0 0.0
        %846 = vmatpush1.msra.mxu0 0.0
        %847 = vmatprep.subr.mxu0 0.0
        %848 = vmatpush1.msra.mxu0 0.0
        %849 = vmatprep.mubr.f32.mxu0 0.0
        %850 = vmatmul.mubr.f32.gmra.mrb[0].mxu0 %v699
        %v851 = vpop.f32.mrb[0].mxu0
        %v852 = vadd.f32 %v783, %v851
        %v853 = vpop.f32.mrb[0].mxu0
        %854 = vdwg.mxu0
        %v855 = vsel %vm580, %v852, -inf
        %856 = vmax.xlane.f32.xlu0 %v855
        %v857 = vpop.xlane.xlu0 %856
        %v858 = vsub.f32 %v852, %v857
        %v859 = vmul.f32 %v858, 1.442695
        %v860 = vpow.pop %v859
        %v861 = vsel %vm580, %v860, 0.0
        %862 = vadd.xlane.f32.xlu0 %v861
        %v863 = vpop.xlane.xlu0 %862
        %v864 = vrcp.pop %v863
        %v865 = vmul.f32 %v860, %v864
        %866 = vst.msk [vmem:[%s459] sm:$0xff] %vm580, %v865
        %s867 = scalar_lea.vmem %s409, 8 [#allocation5]
        %v868 = vld [vmem:[%s867] sm:$0xff]
        %v869 = vld [vmem:[#allocation2] sm:$0xff]
        %v870 = vld [vmem:[#allocation3] sm:$0xff]
        %v872 = vsel %vm506, %v869, 0
        %874 = vmatprep.subr.mxu0 0.0
        %875 = vmatpush1.msra.mxu0 %v482
        %876 = vmatprep.subr.mxu0 0.0
        %877 = vmatpush1.msra.mxu0 %v483
        %878 = vmatprep.subr.mxu0 0.0
        %879 = vmatpush1.msra.mxu0 %v484
        %880 = vmatprep.subr.mxu0 0.0
        %881 = vmatpush1.msra.mxu0 %v485
        %882 = vmatprep.subr.mxu0 0.0
        %883 = vmatpush1.msra.mxu0 0.0
        %884 = vmatprep.subr.mxu0 0.0
        %885 = vmatpush1.msra.mxu0 0.0
        %886 = vmatprep.subr.mxu0 0.0
        %887 = vmatpush1.msra.mxu0 0.0
        %888 = vmatprep.subr.mxu0 0.0
        %889 = vmatpush1.msra.mxu0 0.0
        %890 = vmatprep.subr.mxu0 0.0
        %891 = vmatpush1.msra.mxu0 0.0
        %892 = vmatprep.subr.mxu0 0.0
        %893 = vmatpush1.msra.mxu0 0.0
        %894 = vmatprep.subr.mxu0 0.0
        %895 = vmatpush1.msra.mxu0 0.0
        %896 = vmatprep.subr.mxu0 0.0
        %897 = vmatpush1.msra.mxu0 0.0
        %898 = vmatprep.subr.mxu0 0.0
        %899 = vmatpush1.msra.mxu0 0.0
        %900 = vmatprep.subr.mxu0 0.0
        %901 = vmatpush1.msra.mxu0 0.0
        %902 = vmatprep.subr.mxu0 0.0
        %903 = vmatpush1.msra.mxu0 0.0
        %904 = vmatprep.subr.mxu0 0.0
        %905 = vmatpush1.msra.mxu0 0.0
        %906 = vmatprep.subr.mxu0 0.0
        %907 = vmatpush1.msra.mxu0 0.0
        %908 = vmatprep.subr.mxu0 0.0
        %909 = vmatpush1.msra.mxu0 0.0
        %910 = vmatprep.subr.mxu0 0.0
        %911 = vmatpush1.msra.mxu0 0.0
        %912 = vmatprep.subr.mxu0 0.0
        %913 = vmatpush1.msra.mxu0 0.0
        %914 = vmatprep.subr.mxu0 0.0
        %915 = vmatpush1.msra.mxu0 0.0
        %916 = vmatprep.subr.mxu0 0.0
        %917 = vmatpush1.msra.mxu0 0.0
        %918 = vmatprep.subr.mxu0 0.0
        %919 = vmatpush1.msra.mxu0 0.0
        %920 = vmatprep.subr.mxu0 0.0
        %921 = vmatpush1.msra.mxu0 0.0
        %922 = vmatprep.subr.mxu0 0.0
        %923 = vmatpush1.msra.mxu0 0.0
        %924 = vmatprep.subr.mxu0 0.0
        %925 = vmatpush1.msra.mxu0 0.0
        %926 = vmatprep.subr.mxu0 0.0
        %927 = vmatpush1.msra.mxu0 0.0
        %928 = vmatprep.subr.mxu0 0.0
        %929 = vmatpush1.msra.mxu0 0.0
        %930 = vmatprep.subr.mxu0 0.0
        %931 = vmatpush1.msra.mxu0 0.0
        %932 = vmatprep.subr.mxu0 0.0
        %933 = vmatpush1.msra.mxu0 0.0
        %934 = vmatprep.subr.mxu0 0.0
        %935 = vmatpush1.msra.mxu0 0.0
        %936 = vmatprep.subr.mxu0 0.0
        %937 = vmatpush1.msra.mxu0 0.0
        %938 = vmatprep.mubr.f32.mxu0 0.0
        %939 = vmatmul.mubr.f32.gmra.mrb[0].mxu0 %v872
        %v940 = vpop.f32.mrb[0].mxu0
        %v941 = vadd.f32 0.0, %v940
        %v942 = vpop.f32.mrb[0].mxu0
        %943 = vdwg.mxu0
        %v945 = vsel %vm580, %v868, 0
        %947 = vmatprep.subr.mxu0 0.0
        %948 = vmatpush1.msra.mxu0 %v480
        %949 = vmatprep.subr.mxu0 0.0
        %950 = vmatpush1.msra.mxu0 %v481
        %951 = vmatprep.subr.mxu0 0.0
        %952 = vmatpush1.msra.mxu0 0.0
        %953 = vmatprep.subr.mxu0 0.0
        %954 = vmatpush1.msra.mxu0 0.0
        %955 = vmatprep.subr.mxu0 0.0
        %956 = vmatpush1.msra.mxu0 0.0
        %957 = vmatprep.subr.mxu0 0.0
        %958 = vmatpush1.msra.mxu0 0.0
        %959 = vmatprep.subr.mxu0 0.0
        %960 = vmatpush1.msra.mxu0 0.0
        %961 = vmatprep.subr.mxu0 0.0
        %962 = vmatpush1.msra.mxu0 0.0
        %963 = vmatprep.subr.mxu0 0.0
        %964 = vmatpush1.msra.mxu0 0.0
        %965 = vmatprep.subr.mxu0 0.0
        %966 = vmatpush1.msra.mxu0 0.0
        %967 = vmatprep.subr.mxu0 0.0
        %968 = vmatpush1.msra.mxu0 0.0
        %969 = vmatprep.subr.mxu0 0.0
        %970 = vmatpush1.msra.mxu0 0.0
        %971 = vmatprep.subr.mxu0 0.0
        %972 = vmatpush1.msra.mxu0 0.0
        %973 = vmatprep.subr.mxu0 0.0
        %974 = vmatpush1.msra.mxu0 0.0
        %975 = vmatprep.subr.mxu0 0.0
        %976 = vmatpush1.msra.mxu0 0.0
        %977 = vmatprep.subr.mxu0 0.0
        %978 = vmatpush1.msra.mxu0 0.0
        %979 = vmatprep.subr.mxu0 0.0
        %980 = vmatpush1.msra.mxu0 0.0
        %981 = vmatprep.subr.mxu0 0.0
        %982 = vmatpush1.msra.mxu0 0.0
        %983 = vmatprep.subr.mxu0 0.0
        %984 = vmatpush1.msra.mxu0 0.0
        %985 = vmatprep.subr.mxu0 0.0
        %986 = vmatpush1.msra.mxu0 0.0
        %987 = vmatprep.subr.mxu0 0.0
        %988 = vmatpush1.msra.mxu0 0.0
        %989 = vmatprep.subr.mxu0 0.0
        %990 = vmatpush1.msra.mxu0 0.0
        %991 = vmatprep.subr.mxu0 0.0
        %992 = vmatpush1.msra.mxu0 0.0
        %993 = vmatprep.subr.mxu0 0.0
        %994 = vmatpush1.msra.mxu0 0.0
        %995 = vmatprep.subr.mxu0 0.0
        %996 = vmatpush1.msra.mxu0 0.0
        %997 = vmatprep.subr.mxu0 0.0
        %998 = vmatpush1.msra.mxu0 0.0
        %999 = vmatprep.subr.mxu0 0.0
        %1000 = vmatpush1.msra.mxu0 0.0
        %1001 = vmatprep.subr.mxu0 0.0
        %1002 = vmatpush1.msra.mxu0 0.0
        %1003 = vmatprep.subr.mxu0 0.0
        %1004 = vmatpush1.msra.mxu0 0.0
        %1005 = vmatprep.subr.mxu0 0.0
        %1006 = vmatpush1.msra.mxu0 0.0
        %1007 = vmatprep.subr.mxu0 0.0
        %1008 = vmatpush1.msra.mxu0 0.0
        %1009 = vmatprep.subr.mxu0 0.0
        %1010 = vmatpush1.msra.mxu0 0.0
        %1011 = vmatprep.mubr.f32.mxu0 0.0
        %1012 = vmatmul.mubr.f32.gmra.mrb[0].mxu0 %v945
        %v1013 = vpop.f32.mrb[0].mxu0
        %v1014 = vadd.f32 %v941, %v1013
        %v1015 = vpop.f32.mrb[0].mxu0
        %1016 = vdwg.mxu0
        %v1017 = vadd.f32 %v1014, %v501
        %v1018 = vxor.u32 %v1017, 2147483648
        %v1019 = vmul.f32 %v1018, 1.442695
        %v1020 = vpow.pop %v1019
        %v1021 = vadd.f32 %v1020, 1.0
        %v1022 = vrcp.pop %v1021
        %v1023 = vmul.f32 1.0, %v1022
        %v1024 = vtanh.pop %v1017
        %1026 = vrot.lane.b32.xlu0 %v870, 32
        %v1027 = vpop.permute.xlu0 %1026
        %v1029 = vmul.f32 %v1023, %v1027
        %1031 = vrot.lane.b32.xlu0 %v1024, 64
        %v1032 = vpop.permute.xlu0 %1031
        %v1034 = vmul.f32 %v1023, %v1032
        %1036 = vrot.lane.b32.xlu0 %v1034, 32
        %v1037 = vpop.permute.xlu0 %1036
        %v1039 = vadd.f32 %v1029, %v1037
        %v1040 = vtanh.pop %v1039
        %1042 = vrot.lane.b32.xlu0 %v1040, 64
        %v1043 = vpop.permute.xlu0 %1042
        %v1045 = vmul.f32 %v1023, %v1043
        %1047 = vrot.lane.b32.xlu0 %v1045, 32
        %v1048 = vpop.permute.xlu0 %1047
        %1050 = vst.msk [vmem:[#allocation2] sm:$0xff] %vm506, %v1048
        %1052 = vrot.lane.b32.xlu0 %v1039, 96
        %v1053 = vpop.permute.xlu0 %1052
        %1055 = vst.msk [vmem:[#allocation3] sm:$0xff] %vm506, %v1053
        %v1056 = vsel %vm506, %v1048, 0
        %1058 = vmatprep.subr.mxu0 0.0
        %1059 = vmatpush1.msra.mxu0 %v486
        %1060 = vmatprep.subr.mxu0 0.0
        %1061 = vmatpush1.msra.mxu0 %v487
        %1062 = vmatprep.subr.mxu0 0.0
        %1063 = vmatpush1.msra.mxu0 %v488
        %1064 = vmatprep.subr.mxu0 0.0
        %1065 = vmatpush1.msra.mxu0 %v489
        %1066 = vmatprep.subr.mxu0 0.0
        %1067 = vmatpush1.msra.mxu0 0.0
        %1068 = vmatprep.subr.mxu0 0.0
        %1069 = vmatpush1.msra.mxu0 0.0
        %1070 = vmatprep.subr.mxu0 0.0
        %1071 = vmatpush1.msra.mxu0 0.0
        %1072 = vmatprep.subr.mxu0 0.0
        %1073 = vmatpush1.msra.mxu0 0.0
        %1074 = vmatprep.subr.mxu0 0.0
        %1075 = vmatpush1.msra.mxu0 0.0
        %1076 = vmatprep.subr.mxu0 0.0
        %1077 = vmatpush1.msra.mxu0 0.0
        %1078 = vmatprep.subr.mxu0 0.0
        %1079 = vmatpush1.msra.mxu0 0.0
        %1080 = vmatprep.subr.mxu0 0.0
        %1081 = vmatpush1.msra.mxu0 0.0
        %1082 = vmatprep.subr.mxu0 0.0
        %1083 = vmatpush1.msra.mxu0 0.0
        %1084 = vmatprep.subr.mxu0 0.0
        %1085 = vmatpush1.msra.mxu0 0.0
        %1086 = vmatprep.subr.mxu0 0.0
        %1087 = vmatpush1.msra.mxu0 0.0
        %1088 = vmatprep.subr.mxu0 0.0
        %1089 = vmatpush1.msra.mxu0 0.0
        %1090 = vmatprep.subr.mxu0 0.0
        %1091 = vmatpush1.msra.mxu0 0.0
        %1092 = vmatprep.subr.mxu0 0.0
        %1093 = vmatpush1.msra.mxu0 0.0
        %1094 = vmatprep.subr.mxu0 0.0
        %1095 = vmatpush1.msra.mxu0 0.0
        %1096 = vmatprep.subr.mxu0 0.0
        %1097 = vmatpush1.msra.mxu0 0.0
        %1098 = vmatprep.subr.mxu0 0.0
        %1099 = vmatpush1.msra.mxu0 0.0
        %1100 = vmatprep.subr.mxu0 0.0
        %1101 = vmatpush1.msra.mxu0 0.0
        %1102 = vmatprep.subr.mxu0 0.0
        %1103 = vmatpush1.msra.mxu0 0.0
        %1104 = vmatprep.subr.mxu0 0.0
        %1105 = vmatpush1.msra.mxu0 0.0
        %1106 = vmatprep.subr.mxu0 0.0
        %1107 = vmatpush1.msra.mxu0 0.0
        %1108 = vmatprep.subr.mxu0 0.0
        %1109 = vmatpush1.msra.mxu0 0.0
        %1110 = vmatprep.subr.mxu0 0.0
        %1111 = vmatpush1.msra.mxu0 0.0
        %1112 = vmatprep.subr.mxu0 0.0
        %1113 = vmatpush1.msra.mxu0 0.0
        %1114 = vmatprep.subr.mxu0 0.0
        %1115 = vmatpush1.msra.mxu0 0.0
        %1116 = vmatprep.subr.mxu0 0.0
        %1117 = vmatpush1.msra.mxu0 0.0
        %1118 = vmatprep.subr.mxu0 0.0
        %1119 = vmatpush1.msra.mxu0 0.0
        %1120 = vmatprep.subr.mxu0 0.0
        %1121 = vmatpush1.msra.mxu0 0.0
        %1122 = vmatprep.mubr.f32.mxu0 0.0
        %1123 = vmatmul.mubr.f32.gmra.mrb[0].mxu0 %v1056
        %v1124 = vpop.f32.mrb[0].mxu0
        %v1125 = vadd.f32 %v697, %v1124
        %v1126 = vpop.f32.mrb[0].mxu0
        %1127 = vdwg.mxu0
        %v1128 = vxor.u32 %v1125, 2147483648
        %v1129 = vmul.f32 %v1128, 1.442695
        %v1130 = vpow.pop %v1129
        %v1131 = vadd.f32 %v1130, 1.0
        %v1132 = vrcp.pop %v1131
        %v1133 = vmul.f32 1.0, %v1132
        %s1134 = scalar_lea.vmem %s452, 8 [#allocation8]
        %1135 = vst.msk [vmem:[%s1134] sm:$0xff] %vm777, %v1133
        %1136 = vmatprep.subr.mxu0 0.0
        %1137 = vmatpush1.msra.mxu0 %v491
        %1138 = vmatprep.subr.mxu0 0.0
        %1139 = vmatpush1.msra.mxu0 %v492
        %1140 = vmatprep.subr.mxu0 0.0
        %1141 = vmatpush1.msra.mxu0 %v493
        %1142 = vmatprep.subr.mxu0 0.0
        %1143 = vmatpush1.msra.mxu0 %v494
        %1144 = vmatprep.subr.mxu0 0.0
        %1145 = vmatpush1.msra.mxu0 0.0
        %1146 = vmatprep.subr.mxu0 0.0
        %1147 = vmatpush1.msra.mxu0 0.0
        %1148 = vmatprep.subr.mxu0 0.0
        %1149 = vmatpush1.msra.mxu0 0.0
        %1150 = vmatprep.subr.mxu0 0.0
        %1151 = vmatpush1.msra.mxu0 0.0
        %1152 = vmatprep.subr.mxu0 0.0
        %1153 = vmatpush1.msra.mxu0 0.0
        %1154 = vmatprep.subr.mxu0 0.0
        %1155 = vmatpush1.msra.mxu0 0.0
        %1156 = vmatprep.subr.mxu0 0.0
        %1157 = vmatpush1.msra.mxu0 0.0
        %1158 = vmatprep.subr.mxu0 0.0
        %1159 = vmatpush1.msra.mxu0 0.0
        %1160 = vmatprep.subr.mxu0 0.0
        %1161 = vmatpush1.msra.mxu0 0.0
        %1162 = vmatprep.subr.mxu0 0.0
        %1163 = vmatpush1.msra.mxu0 0.0
        %1164 = vmatprep.subr.mxu0 0.0
        %1165 = vmatpush1.msra.mxu0 0.0
        %1166 = vmatprep.subr.mxu0 0.0
        %1167 = vmatpush1.msra.mxu0 0.0
        %1168 = vmatprep.subr.mxu0 0.0
        %1169 = vmatpush1.msra.mxu0 0.0
        %1170 = vmatprep.subr.mxu0 0.0
        %1171 = vmatpush1.msra.mxu0 0.0
        %1172 = vmatprep.subr.mxu0 0.0
        %1173 = vmatpush1.msra.mxu0 0.0
        %1174 = vmatprep.subr.mxu0 0.0
        %1175 = vmatpush1.msra.mxu0 0.0
        %1176 = vmatprep.subr.mxu0 0.0
        %1177 = vmatpush1.msra.mxu0 0.0
        %1178 = vmatprep.subr.mxu0 0.0
        %1179 = vmatpush1.msra.mxu0 0.0
        %1180 = vmatprep.subr.mxu0 0.0
        %1181 = vmatpush1.msra.mxu0 0.0
        %1182 = vmatprep.subr.mxu0 0.0
        %1183 = vmatpush1.msra.mxu0 0.0
        %1184 = vmatprep.subr.mxu0 0.0
        %1185 = vmatpush1.msra.mxu0 0.0
        %1186 = vmatprep.subr.mxu0 0.0
        %1187 = vmatpush1.msra.mxu0 0.0
        %1188 = vmatprep.subr.mxu0 0.0
        %1189 = vmatpush1.msra.mxu0 0.0
        %1190 = vmatprep.subr.mxu0 0.0
        %1191 = vmatpush1.msra.mxu0 0.0
        %1192 = vmatprep.subr.mxu0 0.0
        %1193 = vmatpush1.msra.mxu0 0.0
        %1194 = vmatprep.subr.mxu0 0.0
        %1195 = vmatpush1.msra.mxu0 0.0
        %1196 = vmatprep.subr.mxu0 0.0
        %1197 = vmatpush1.msra.mxu0 0.0
        %1198 = vmatprep.subr.mxu0 0.0
        %1199 = vmatpush1.msra.mxu0 0.0
        %1200 = vmatprep.mubr.f32.mxu0 0.0
        %1201 = vmatmul.mubr.f32.gmra.mrb[0].mxu0 %v1056
        %v1202 = vpop.f32.mrb[0].mxu0
        %v1203 = vadd.f32 %v783, %v1202
        %v1204 = vpop.f32.mrb[0].mxu0
        %1205 = vdwg.mxu0
        %v1206 = vsel %vm580, %v1203, -inf
        %1207 = vmax.xlane.f32.xlu0 %v1206
        %v1208 = vpop.xlane.xlu0 %1207
        %v1209 = vsub.f32 %v1203, %v1208
        %v1210 = vmul.f32 %v1209, 1.442695
        %v1211 = vpow.pop %v1210
        %v1212 = vsel %vm580, %v1211, 0.0
        %1213 = vadd.xlane.f32.xlu0 %v1212
        %v1214 = vpop.xlane.xlu0 %1213
        %v1215 = vrcp.pop %v1214
        %v1216 = vmul.f32 %v1211, %v1215
        %s1217 = scalar_lea.vmem %s459, 8 [#allocation9]
        %1218 = vst.msk [vmem:[%s1217] sm:$0xff] %vm580, %v1216
        %s1219 = scalar_lea.vmem %s409, 16 [#allocation5]
        %v1220 = vld [vmem:[%s1219] sm:$0xff]
        %v1221 = vld [vmem:[#allocation2] sm:$0xff]
        %v1222 = vld [vmem:[#allocation3] sm:$0xff]
        %v1224 = vsel %vm506, %v1221, 0
        %1226 = vmatprep.subr.mxu0 0.0
        %1227 = vmatpush1.msra.mxu0 %v482
        %1228 = vmatprep.subr.mxu0 0.0
        %1229 = vmatpush1.msra.mxu0 %v483
        %1230 = vmatprep.subr.mxu0 0.0
        %1231 = vmatpush1.msra.mxu0 %v484
        %1232 = vmatprep.subr.mxu0 0.0
        %1233 = vmatpush1.msra.mxu0 %v485
        %1234 = vmatprep.subr.mxu0 0.0
        %1235 = vmatpush1.msra.mxu0 0.0
        %1236 = vmatprep.subr.mxu0 0.0
        %1237 = vmatpush1.msra.mxu0 0.0
        %1238 = vmatprep.subr.mxu0 0.0
        %1239 = vmatpush1.msra.mxu0 0.0
        %1240 = vmatprep.subr.mxu0 0.0
        %1241 = vmatpush1.msra.mxu0 0.0
        %1242 = vmatprep.subr.mxu0 0.0
        %1243 = vmatpush1.msra.mxu0 0.0
        %1244 = vmatprep.subr.mxu0 0.0
        %1245 = vmatpush1.msra.mxu0 0.0
        %1246 = vmatprep.subr.mxu0 0.0
        %1247 = vmatpush1.msra.mxu0 0.0
        %1248 = vmatprep.subr.mxu0 0.0
        %1249 = vmatpush1.msra.mxu0 0.0
        %1250 = vmatprep.subr.mxu0 0.0
        %1251 = vmatpush1.msra.mxu0 0.0
        %1252 = vmatprep.subr.mxu0 0.0
        %1253 = vmatpush1.msra.mxu0 0.0
        %1254 = vmatprep.subr.mxu0 0.0
        %1255 = vmatpush1.msra.mxu0 0.0
        %1256 = vmatprep.subr.mxu0 0.0
        %1257 = vmatpush1.msra.mxu0 0.0
        %1258 = vmatprep.subr.mxu0 0.0
        %1259 = vmatpush1.msra.mxu0 0.0
        %1260 = vmatprep.subr.mxu0 0.0
        %1261 = vmatpush1.msra.mxu0 0.0
        %1262 = vmatprep.subr.mxu0 0.0
        %1263 = vmatpush1.msra.mxu0 0.0
        %1264 = vmatprep.subr.mxu0 0.0
        %1265 = vmatpush1.msra.mxu0 0.0
        %1266 = vmatprep.subr.mxu0 0.0
        %1267 = vmatpush1.msra.mxu0 0.0
        %1268 = vmatprep.subr.mxu0 0.0
        %1269 = vmatpush1.msra.mxu0 0.0
        %1270 = vmatprep.subr.mxu0 0.0
        %1271 = vmatpush1.msra.mxu0 0.0
        %1272 = vmatprep.subr.mxu0 0.0
        %1273 = vmatpush1.msra.mxu0 0.0
        %1274 = vmatprep.subr.mxu0 0.0
        %1275 = vmatpush1.msra.mxu0 0.0
        %1276 = vmatprep.subr.mxu0 0.0
        %1277 = vmatpush1.msra.mxu0 0.0
        %1278 = vmatprep.subr.mxu0 0.0
        %1279 = vmatpush1.msra.mxu0 0.0
        %1280 = vmatprep.subr.mxu0 0.0
        %1281 = vmatpush1.msra.mxu0 0.0
        %1282 = vmatprep.subr.mxu0 0.0
        %1283 = vmatpush1.msra.mxu0 0.0
        %1284 = vmatprep.subr.mxu0 0.0
        %1285 = vmatpush1.msra.mxu0 0.0
        %1286 = vmatprep.subr.mxu0 0.0
        %1287 = vmatpush1.msra.mxu0 0.0
        %1288 = vmatprep.subr.mxu0 0.0
        %1289 = vmatpush1.msra.mxu0 0.0
        %1290 = vmatprep.mubr.f32.mxu0 0.0
        %1291 = vmatmul.mubr.f32.gmra.mrb[0].mxu0 %v1224
        %v1292 = vpop.f32.mrb[0].mxu0
        %v1293 = vadd.f32 0.0, %v1292
        %v1294 = vpop.f32.mrb[0].mxu0
        %1295 = vdwg.mxu0
        %v1297 = vsel %vm580, %v1220, 0
        %1299 = vmatprep.subr.mxu0 0.0
        %1300 = vmatpush1.msra.mxu0 %v480
        %1301 = vmatprep.subr.mxu0 0.0
        %1302 = vmatpush1.msra.mxu0 %v481
        %1303 = vmatprep.subr.mxu0 0.0
        %1304 = vmatpush1.msra.mxu0 0.0
        %1305 = vmatprep.subr.mxu0 0.0
        %1306 = vmatpush1.msra.mxu0 0.0
        %1307 = vmatprep.subr.mxu0 0.0
        %1308 = vmatpush1.msra.mxu0 0.0
        %1309 = vmatprep.subr.mxu0 0.0
        %1310 = vmatpush1.msra.mxu0 0.0
        %1311 = vmatprep.subr.mxu0 0.0
        %1312 = vmatpush1.msra.mxu0 0.0
        %1313 = vmatprep.subr.mxu0 0.0
        %1314 = vmatpush1.msra.mxu0 0.0
        %1315 = vmatprep.subr.mxu0 0.0
        %1316 = vmatpush1.msra.mxu0 0.0
        %1317 = vmatprep.subr.mxu0 0.0
        %1318 = vmatpush1.msra.mxu0 0.0
        %1319 = vmatprep.subr.mxu0 0.0
        %1320 = vmatpush1.msra.mxu0 0.0
        %1321 = vmatprep.subr.mxu0 0.0
        %1322 = vmatpush1.msra.mxu0 0.0
        %1323 = vmatprep.subr.mxu0 0.0
        %1324 = vmatpush1.msra.mxu0 0.0
        %1325 = vmatprep.subr.mxu0 0.0
        %1326 = vmatpush1.msra.mxu0 0.0
        %1327 = vmatprep.subr.mxu0 0.0
        %1328 = vmatpush1.msra.mxu0 0.0
        %1329 = vmatprep.subr.mxu0 0.0
        %1330 = vmatpush1.msra.mxu0 0.0
        %1331 = vmatprep.subr.mxu0 0.0
        %1332 = vmatpush1.msra.mxu0 0.0
        %1333 = vmatprep.subr.mxu0 0.0
        %1334 = vmatpush1.msra.mxu0 0.0
        %1335 = vmatprep.subr.mxu0 0.0
        %1336 = vmatpush1.msra.mxu0 0.0
        %1337 = vmatprep.subr.mxu0 0.0
        %1338 = vmatpush1.msra.mxu0 0.0
        %1339 = vmatprep.subr.mxu0 0.0
        %1340 = vmatpush1.msra.mxu0 0.0
        %1341 = vmatprep.subr.mxu0 0.0
        %1342 = vmatpush1.msra.mxu0 0.0
        %1343 = vmatprep.subr.mxu0 0.0
        %1344 = vmatpush1.msra.mxu0 0.0
        %1345 = vmatprep.subr.mxu0 0.0
        %1346 = vmatpush1.msra.mxu0 0.0
        %1347 = vmatprep.subr.mxu0 0.0
        %1348 = vmatpush1.msra.mxu0 0.0
        %1349 = vmatprep.subr.mxu0 0.0
        %1350 = vmatpush1.msra.mxu0 0.0
        %1351 = vmatprep.subr.mxu0 0.0
        %1352 = vmatpush1.msra.mxu0 0.0
        %1353 = vmatprep.subr.mxu0 0.0
        %1354 = vmatpush1.msra.mxu0 0.0
        %1355 = vmatprep.subr.mxu0 0.0
        %1356 = vmatpush1.msra.mxu0 0.0
        %1357 = vmatprep.subr.mxu0 0.0
        %1358 = vmatpush1.msra.mxu0 0.0
        %1359 = vmatprep.subr.mxu0 0.0
        %1360 = vmatpush1.msra.mxu0 0.0
        %1361 = vmatprep.subr.mxu0 0.0
        %1362 = vmatpush1.msra.mxu0 0.0
        %1363 = vmatprep.mubr.f32.mxu0 0.0
        %1364 = vmatmul.mubr.f32.gmra.mrb[0].mxu0 %v1297
        %v1365 = vpop.f32.mrb[0].mxu0
        %v1366 = vadd.f32 %v1293, %v1365
        %v1367 = vpop.f32.mrb[0].mxu0
        %1368 = vdwg.mxu0
        %v1369 = vadd.f32 %v1366, %v501
        %v1370 = vxor.u32 %v1369, 2147483648
        %v1371 = vmul.f32 %v1370, 1.442695
        %v1372 = vpow.pop %v1371
        %v1373 = vadd.f32 %v1372, 1.0
        %v1374 = vrcp.pop %v1373
        %v1375 = vmul.f32 1.0, %v1374
        %v1376 = vtanh.pop %v1369
        %1378 = vrot.lane.b32.xlu0 %v1222, 32
        %v1379 = vpop.permute.xlu0 %1378
        %v1381 = vmul.f32 %v1375, %v1379
        %1383 = vrot.lane.b32.xlu0 %v1376, 64
        %v1384 = vpop.permute.xlu0 %1383
        %v1386 = vmul.f32 %v1375, %v1384
        %1388 = vrot.lane.b32.xlu0 %v1386, 32
        %v1389 = vpop.permute.xlu0 %1388
        %v1391 = vadd.f32 %v1381, %v1389
        %v1392 = vtanh.pop %v1391
        %1394 = vrot.lane.b32.xlu0 %v1392, 64
        %v1395 = vpop.permute.xlu0 %1394
        %v1397 = vmul.f32 %v1375, %v1395
        %1399 = vrot.lane.b32.xlu0 %v1397, 32
        %v1400 = vpop.permute.xlu0 %1399
        %1402 = vst.msk [vmem:[#allocation2] sm:$0xff] %vm506, %v1400
        %1404 = vrot.lane.b32.xlu0 %v1391, 96
        %v1405 = vpop.permute.xlu0 %1404
        %1407 = vst.msk [vmem:[#allocation3] sm:$0xff] %vm506, %v1405
        %v1408 = vsel %vm506, %v1400, 0
        %1410 = vmatprep.subr.mxu0 0.0
        %1411 = vmatpush1.msra.mxu0 %v486
        %1412 = vmatprep.subr.mxu0 0.0
        %1413 = vmatpush1.msra.mxu0 %v487
        %1414 = vmatprep.subr.mxu0 0.0
        %1415 = vmatpush1.msra.mxu0 %v488
        %1416 = vmatprep.subr.mxu0 0.0
        %1417 = vmatpush1.msra.mxu0 %v489
        %1418 = vmatprep.subr.mxu0 0.0
        %1419 = vmatpush1.msra.mxu0 0.0
        %1420 = vmatprep.subr.mxu0 0.0
        %1421 = vmatpush1.msra.mxu0 0.0
        %1422 = vmatprep.subr.mxu0 0.0
        %1423 = vmatpush1.msra.mxu0 0.0
        %1424 = vmatprep.subr.mxu0 0.0
        %1425 = vmatpush1.msra.mxu0 0.0
        %1426 = vmatprep.subr.mxu0 0.0
        %1427 = vmatpush1.msra.mxu0 0.0
        %1428 = vmatprep.subr.mxu0 0.0
        %1429 = vmatpush1.msra.mxu0 0.0
        %1430 = vmatprep.subr.mxu0 0.0
        %1431 = vmatpush1.msra.mxu0 0.0
        %1432 = vmatprep.subr.mxu0 0.0
        %1433 = vmatpush1.msra.mxu0 0.0
        %1434 = vmatprep.subr.mxu0 0.0
        %1435 = vmatpush1.msra.mxu0 0.0
        %1436 = vmatprep.subr.mxu0 0.0
        %1437 = vmatpush1.msra.mxu0 0.0
        %1438 = vmatprep.subr.mxu0 0.0
        %1439 = vmatpush1.msra.mxu0 0.0
        %1440 = vmatprep.subr.mxu0 0.0
        %1441 = vmatpush1.msra.mxu0 0.0
        %1442 = vmatprep.subr.mxu0 0.0
        %1443 = vmatpush1.msra.mxu0 0.0
        %1444 = vmatprep.subr.mxu0 0.0
        %1445 = vmatpush1.msra.mxu0 0.0
        %1446 = vmatprep.subr.mxu0 0.0
        %1447 = vmatpush1.msra.mxu0 0.0
        %1448 = vmatprep.subr.mxu0 0.0
        %1449 = vmatpush1.msra.mxu0 0.0
        %1450 = vmatprep.subr.mxu0 0.0
        %1451 = vmatpush1.msra.mxu0 0.0
        %1452 = vmatprep.subr.mxu0 0.0
        %1453 = vmatpush1.msra.mxu0 0.0
        %1454 = vmatprep.subr.mxu0 0.0
        %1455 = vmatpush1.msra.mxu0 0.0
        %1456 = vmatprep.subr.mxu0 0.0
        %1457 = vmatpush1.msra.mxu0 0.0
        %1458 = vmatprep.subr.mxu0 0.0
        %1459 = vmatpush1.msra.mxu0 0.0
        %1460 = vmatprep.subr.mxu0 0.0
        %1461 = vmatpush1.msra.mxu0 0.0
        %1462 = vmatprep.subr.mxu0 0.0
        %1463 = vmatpush1.msra.mxu0 0.0
        %1464 = vmatprep.subr.mxu0 0.0
        %1465 = vmatpush1.msra.mxu0 0.0
        %1466 = vmatprep.subr.mxu0 0.0
        %1467 = vmatpush1.msra.mxu0 0.0
        %1468 = vmatprep.subr.mxu0 0.0
        %1469 = vmatpush1.msra.mxu0 0.0
        %1470 = vmatprep.subr.mxu0 0.0
        %1471 = vmatpush1.msra.mxu0 0.0
        %1472 = vmatprep.subr.mxu0 0.0
        %1473 = vmatpush1.msra.mxu0 0.0
        %1474 = vmatprep.mubr.f32.mxu0 0.0
        %1475 = vmatmul.mubr.f32.gmra.mrb[0].mxu0 %v1408
        %v1476 = vpop.f32.mrb[0].mxu0
        %v1477 = vadd.f32 %v697, %v1476
        %v1478 = vpop.f32.mrb[0].mxu0
        %1479 = vdwg.mxu0
        %v1480 = vxor.u32 %v1477, 2147483648
        %v1481 = vmul.f32 %v1480, 1.442695
        %v1482 = vpow.pop %v1481
        %v1483 = vadd.f32 %v1482, 1.0
        %v1484 = vrcp.pop %v1483
        %v1485 = vmul.f32 1.0, %v1484
        %s1486 = scalar_lea.vmem %s452, 16 [#allocation8]
        %1487 = vst.msk [vmem:[%s1486] sm:$0xff] %vm777, %v1485
        %1488 = vmatprep.subr.mxu0 0.0
        %1489 = vmatpush1.msra.mxu0 %v491
        %1490 = vmatprep.subr.mxu0 0.0
        %1491 = vmatpush1.msra.mxu0 %v492
        %1492 = vmatprep.subr.mxu0 0.0
        %1493 = vmatpush1.msra.mxu0 %v493
        %1494 = vmatprep.subr.mxu0 0.0
        %1495 = vmatpush1.msra.mxu0 %v494
        %1496 = vmatprep.subr.mxu0 0.0
        %1497 = vmatpush1.msra.mxu0 0.0
        %1498 = vmatprep.subr.mxu0 0.0
        %1499 = vmatpush1.msra.mxu0 0.0
        %1500 = vmatprep.subr.mxu0 0.0
        %1501 = vmatpush1.msra.mxu0 0.0
        %1502 = vmatprep.subr.mxu0 0.0
        %1503 = vmatpush1.msra.mxu0 0.0
        %1504 = vmatprep.subr.mxu0 0.0
        %1505 = vmatpush1.msra.mxu0 0.0
        %1506 = vmatprep.subr.mxu0 0.0
        %1507 = vmatpush1.msra.mxu0 0.0
        %1508 = vmatprep.subr.mxu0 0.0
        %1509 = vmatpush1.msra.mxu0 0.0
        %1510 = vmatprep.subr.mxu0 0.0
        %1511 = vmatpush1.msra.mxu0 0.0
        %1512 = vmatprep.subr.mxu0 0.0
        %1513 = vmatpush1.msra.mxu0 0.0
        %1514 = vmatprep.subr.mxu0 0.0
        %1515 = vmatpush1.msra.mxu0 0.0
        %1516 = vmatprep.subr.mxu0 0.0
        %1517 = vmatpush1.msra.mxu0 0.0
        %1518 = vmatprep.subr.mxu0 0.0
        %1519 = vmatpush1.msra.mxu0 0.0
        %1520 = vmatprep.subr.mxu0 0.0
        %1521 = vmatpush1.msra.mxu0 0.0
        %1522 = vmatprep.subr.mxu0 0.0
        %1523 = vmatpush1.msra.mxu0 0.0
        %1524 = vmatprep.subr.mxu0 0.0
        %1525 = vmatpush1.msra.mxu0 0.0
        %1526 = vmatprep.subr.mxu0 0.0
        %1527 = vmatpush1.msra.mxu0 0.0
        %1528 = vmatprep.subr.mxu0 0.0
        %1529 = vmatpush1.msra.mxu0 0.0
        %1530 = vmatprep.subr.mxu0 0.0
        %1531 = vmatpush1.msra.mxu0 0.0
        %1532 = vmatprep.subr.mxu0 0.0
        %1533 = vmatpush1.msra.mxu0 0.0
        %1534 = vmatprep.subr.mxu0 0.0
        %1535 = vmatpush1.msra.mxu0 0.0
        %1536 = vmatprep.subr.mxu0 0.0
        %1537 = vmatpush1.msra.mxu0 0.0
        %1538 = vmatprep.subr.mxu0 0.0
        %1539 = vmatpush1.msra.mxu0 0.0
        %1540 = vmatprep.subr.mxu0 0.0
        %1541 = vmatpush1.msra.mxu0 0.0
        %1542 = vmatprep.subr.mxu0 0.0
        %1543 = vmatpush1.msra.mxu0 0.0
        %1544 = vmatprep.subr.mxu0 0.0
        %1545 = vmatpush1.msra.mxu0 0.0
        %1546 = vmatprep.subr.mxu0 0.0
        %1547 = vmatpush1.msra.mxu0 0.0
        %1548 = vmatprep.subr.mxu0 0.0
        %1549 = vmatpush1.msra.mxu0 0.0
        %1550 = vmatprep.subr.mxu0 0.0
        %1551 = vmatpush1.msra.mxu0 0.0
        %1552 = vmatprep.mubr.f32.mxu0 0.0
        %1553 = vmatmul.mubr.f32.gmra.mrb[0].mxu0 %v1408
        %v1554 = vpop.f32.mrb[0].mxu0
        %v1555 = vadd.f32 %v783, %v1554
        %v1556 = vpop.f32.mrb[0].mxu0
        %1557 = vdwg.mxu0
        %v1558 = vsel %vm580, %v1555, -inf
        %1559 = vmax.xlane.f32.xlu0 %v1558
        %v1560 = vpop.xlane.xlu0 %1559
        %v1561 = vsub.f32 %v1555, %v1560
        %v1562 = vmul.f32 %v1561, 1.442695
        %v1563 = vpow.pop %v1562
        %v1564 = vsel %vm580, %v1563, 0.0
        %1565 = vadd.xlane.f32.xlu0 %v1564
        %v1566 = vpop.xlane.xlu0 %1565
        %v1567 = vrcp.pop %v1566
        %v1568 = vmul.f32 %v1563, %v1567
        %s1569 = scalar_lea.vmem %s459, 16 [#allocation9]
        %1570 = vst.msk [vmem:[%s1569] sm:$0xff] %vm580, %v1568
        %s1571 = scalar_lea.vmem %s409, 24 [#allocation5]
        %v1572 = vld [vmem:[%s1571] sm:$0xff]
        %v1573 = vld [vmem:[#allocation2] sm:$0xff]
        %v1574 = vld [vmem:[#allocation3] sm:$0xff]
        %v1576 = vsel %vm506, %v1573, 0
        %1578 = vmatprep.subr.mxu0 0.0
        %1579 = vmatpush1.msra.mxu0 %v482
        %1580 = vmatprep.subr.mxu0 0.0
        %1581 = vmatpush1.msra.mxu0 %v483
        %1582 = vmatprep.subr.mxu0 0.0
        %1583 = vmatpush1.msra.mxu0 %v484
        %1584 = vmatprep.subr.mxu0 0.0
        %1585 = vmatpush1.msra.mxu0 %v485
        %1586 = vmatprep.subr.mxu0 0.0
        %1587 = vmatpush1.msra.mxu0 0.0
        %1588 = vmatprep.subr.mxu0 0.0
        %1589 = vmatpush1.msra.mxu0 0.0
        %1590 = vmatprep.subr.mxu0 0.0
        %1591 = vmatpush1.msra.mxu0 0.0
        %1592 = vmatprep.subr.mxu0 0.0
        %1593 = vmatpush1.msra.mxu0 0.0
        %1594 = vmatprep.subr.mxu0 0.0
        %1595 = vmatpush1.msra.mxu0 0.0
        %1596 = vmatprep.subr.mxu0 0.0
        %1597 = vmatpush1.msra.mxu0 0.0
        %1598 = vmatprep.subr.mxu0 0.0
        %1599 = vmatpush1.msra.mxu0 0.0
        %1600 = vmatprep.subr.mxu0 0.0
        %1601 = vmatpush1.msra.mxu0 0.0
        %1602 = vmatprep.subr.mxu0 0.0
        %1603 = vmatpush1.msra.mxu0 0.0
        %1604 = vmatprep.subr.mxu0 0.0
        %1605 = vmatpush1.msra.mxu0 0.0
        %1606 = vmatprep.subr.mxu0 0.0
        %1607 = vmatpush1.msra.mxu0 0.0
        %1608 = vmatprep.subr.mxu0 0.0
        %1609 = vmatpush1.msra.mxu0 0.0
        %1610 = vmatprep.subr.mxu0 0.0
        %1611 = vmatpush1.msra.mxu0 0.0
        %1612 = vmatprep.subr.mxu0 0.0
        %1613 = vmatpush1.msra.mxu0 0.0
        %1614 = vmatprep.subr.mxu0 0.0
        %1615 = vmatpush1.msra.mxu0 0.0
        %1616 = vmatprep.subr.mxu0 0.0
        %1617 = vmatpush1.msra.mxu0 0.0
        %1618 = vmatprep.subr.mxu0 0.0
        %1619 = vmatpush1.msra.mxu0 0.0
        %1620 = vmatprep.subr.mxu0 0.0
        %1621 = vmatpush1.msra.mxu0 0.0
        %1622 = vmatprep.subr.mxu0 0.0
        %1623 = vmatpush1.msra.mxu0 0.0
        %1624 = vmatprep.subr.mxu0 0.0
        %1625 = vmatpush1.msra.mxu0 0.0
        %1626 = vmatprep.subr.mxu0 0.0
        %1627 = vmatpush1.msra.mxu0 0.0
        %1628 = vmatprep.subr.mxu0 0.0
        %1629 = vmatpush1.msra.mxu0 0.0
        %1630 = vmatprep.subr.mxu0 0.0
        %1631 = vmatpush1.msra.mxu0 0.0
        %1632 = vmatprep.subr.mxu0 0.0
        %1633 = vmatpush1.msra.mxu0 0.0
        %1634 = vmatprep.subr.mxu0 0.0
        %1635 = vmatpush1.msra.mxu0 0.0
        %1636 = vmatprep.subr.mxu0 0.0
        %1637 = vmatpush1.msra.mxu0 0.0
        %1638 = vmatprep.subr.mxu0 0.0
        %1639 = vmatpush1.msra.mxu0 0.0
        %1640 = vmatprep.subr.mxu0 0.0
        %1641 = vmatpush1.msra.mxu0 0.0
        %1642 = vmatprep.mubr.f32.mxu0 0.0
        %1643 = vmatmul.mubr.f32.gmra.mrb[0].mxu0 %v1576
        %v1644 = vpop.f32.mrb[0].mxu0
        %v1645 = vadd.f32 0.0, %v1644
        %v1646 = vpop.f32.mrb[0].mxu0
        %1647 = vdwg.mxu0
        %v1649 = vsel %vm580, %v1572, 0
        %1651 = vmatprep.subr.mxu0 0.0
        %1652 = vmatpush1.msra.mxu0 %v480
        %1653 = vmatprep.subr.mxu0 0.0
        %1654 = vmatpush1.msra.mxu0 %v481
        %1655 = vmatprep.subr.mxu0 0.0
        %1656 = vmatpush1.msra.mxu0 0.0
        %1657 = vmatprep.subr.mxu0 0.0
        %1658 = vmatpush1.msra.mxu0 0.0
        %1659 = vmatprep.subr.mxu0 0.0
        %1660 = vmatpush1.msra.mxu0 0.0
        %1661 = vmatprep.subr.mxu0 0.0
        %1662 = vmatpush1.msra.mxu0 0.0
        %1663 = vmatprep.subr.mxu0 0.0
        %1664 = vmatpush1.msra.mxu0 0.0
        %1665 = vmatprep.subr.mxu0 0.0
        %1666 = vmatpush1.msra.mxu0 0.0
        %1667 = vmatprep.subr.mxu0 0.0
        %1668 = vmatpush1.msra.mxu0 0.0
        %1669 = vmatprep.subr.mxu0 0.0
        %1670 = vmatpush1.msra.mxu0 0.0
        %1671 = vmatprep.subr.mxu0 0.0
        %1672 = vmatpush1.msra.mxu0 0.0
        %1673 = vmatprep.subr.mxu0 0.0
        %1674 = vmatpush1.msra.mxu0 0.0
        %1675 = vmatprep.subr.mxu0 0.0
        %1676 = vmatpush1.msra.mxu0 0.0
        %1677 = vmatprep.subr.mxu0 0.0
        %1678 = vmatpush1.msra.mxu0 0.0
        %1679 = vmatprep.subr.mxu0 0.0
        %1680 = vmatpush1.msra.mxu0 0.0
        %1681 = vmatprep.subr.mxu0 0.0
        %1682 = vmatpush1.msra.mxu0 0.0
        %1683 = vmatprep.subr.mxu0 0.0
        %1684 = vmatpush1.msra.mxu0 0.0
        %1685 = vmatprep.subr.mxu0 0.0
        %1686 = vmatpush1.msra.mxu0 0.0
        %1687 = vmatprep.subr.mxu0 0.0
        %1688 = vmatpush1.msra.mxu0 0.0
        %1689 = vmatprep.subr.mxu0 0.0
        %1690 = vmatpush1.msra.mxu0 0.0
        %1691 = vmatprep.subr.mxu0 0.0
        %1692 = vmatpush1.msra.mxu0 0.0
        %1693 = vmatprep.subr.mxu0 0.0
        %1694 = vmatpush1.msra.mxu0 0.0
        %1695 = vmatprep.subr.mxu0 0.0
        %1696 = vmatpush1.msra.mxu0 0.0
        %1697 = vmatprep.subr.mxu0 0.0
        %1698 = vmatpush1.msra.mxu0 0.0
        %1699 = vmatprep.subr.mxu0 0.0
        %1700 = vmatpush1.msra.mxu0 0.0
        %1701 = vmatprep.subr.mxu0 0.0
        %1702 = vmatpush1.msra.mxu0 0.0
        %1703 = vmatprep.subr.mxu0 0.0
        %1704 = vmatpush1.msra.mxu0 0.0
        %1705 = vmatprep.subr.mxu0 0.0
        %1706 = vmatpush1.msra.mxu0 0.0
        %1707 = vmatprep.subr.mxu0 0.0
        %1708 = vmatpush1.msra.mxu0 0.0
        %1709 = vmatprep.subr.mxu0 0.0
        %1710 = vmatpush1.msra.mxu0 0.0
        %1711 = vmatprep.subr.mxu0 0.0
        %1712 = vmatpush1.msra.mxu0 0.0
        %1713 = vmatprep.subr.mxu0 0.0
        %1714 = vmatpush1.msra.mxu0 0.0
        %1715 = vmatprep.mubr.f32.mxu0 0.0
        %1716 = vmatmul.mubr.f32.gmra.mrb[0].mxu0 %v1649
        %v1717 = vpop.f32.mrb[0].mxu0
        %v1718 = vadd.f32 %v1645, %v1717
        %v1719 = vpop.f32.mrb[0].mxu0
        %1720 = vdwg.mxu0
        %v1721 = vadd.f32 %v1718, %v501
        %v1722 = vxor.u32 %v1721, 2147483648
        %v1723 = vmul.f32 %v1722, 1.442695
        %v1724 = vpow.pop %v1723
        %v1725 = vadd.f32 %v1724, 1.0
        %v1726 = vrcp.pop %v1725
        %v1727 = vmul.f32 1.0, %v1726
        %v1728 = vtanh.pop %v1721
        %1730 = vrot.lane.b32.xlu0 %v1574, 32
        %v1731 = vpop.permute.xlu0 %1730
        %v1733 = vmul.f32 %v1727, %v1731
        %1735 = vrot.lane.b32.xlu0 %v1728, 64
        %v1736 = vpop.permute.xlu0 %1735
        %v1738 = vmul.f32 %v1727, %v1736
        %1740 = vrot.lane.b32.xlu0 %v1738, 32
        %v1741 = vpop.permute.xlu0 %1740
        %v1743 = vadd.f32 %v1733, %v1741
        %v1744 = vtanh.pop %v1743
        %1746 = vrot.lane.b32.xlu0 %v1744, 64
        %v1747 = vpop.permute.xlu0 %1746
        %v1749 = vmul.f32 %v1727, %v1747
        %1751 = vrot.lane.b32.xlu0 %v1749, 32
        %v1752 = vpop.permute.xlu0 %1751
        %1754 = vst.msk [vmem:[#allocation2] sm:$0xff] %vm506, %v1752
        %1756 = vrot.lane.b32.xlu0 %v1743, 96
        %v1757 = vpop.permute.xlu0 %1756
        %1759 = vst.msk [vmem:[#allocation3] sm:$0xff] %vm506, %v1757
        %v1760 = vsel %vm506, %v1752, 0
        %1762 = vmatprep.subr.mxu0 0.0
        %1763 = vmatpush1.msra.mxu0 %v486
        %1764 = vmatprep.subr.mxu0 0.0
        %1765 = vmatpush1.msra.mxu0 %v487
        %1766 = vmatprep.subr.mxu0 0.0
        %1767 = vmatpush1.msra.mxu0 %v488
        %1768 = vmatprep.subr.mxu0 0.0
        %1769 = vmatpush1.msra.mxu0 %v489
        %1770 = vmatprep.subr.mxu0 0.0
        %1771 = vmatpush1.msra.mxu0 0.0
        %1772 = vmatprep.subr.mxu0 0.0
        %1773 = vmatpush1.msra.mxu0 0.0
        %1774 = vmatprep.subr.mxu0 0.0
        %1775 = vmatpush1.msra.mxu0 0.0
        %1776 = vmatprep.subr.mxu0 0.0
        %1777 = vmatpush1.msra.mxu0 0.0
        %1778 = vmatprep.subr.mxu0 0.0
        %1779 = vmatpush1.msra.mxu0 0.0
        %1780 = vmatprep.subr.mxu0 0.0
        %1781 = vmatpush1.msra.mxu0 0.0
        %1782 = vmatprep.subr.mxu0 0.0
        %1783 = vmatpush1.msra.mxu0 0.0
        %1784 = vmatprep.subr.mxu0 0.0
        %1785 = vmatpush1.msra.mxu0 0.0
        %1786 = vmatprep.subr.mxu0 0.0
        %1787 = vmatpush1.msra.mxu0 0.0
        %1788 = vmatprep.subr.mxu0 0.0
        %1789 = vmatpush1.msra.mxu0 0.0
        %1790 = vmatprep.subr.mxu0 0.0
        %1791 = vmatpush1.msra.mxu0 0.0
        %1792 = vmatprep.subr.mxu0 0.0
        %1793 = vmatpush1.msra.mxu0 0.0
        %1794 = vmatprep.subr.mxu0 0.0
        %1795 = vmatpush1.msra.mxu0 0.0
        %1796 = vmatprep.subr.mxu0 0.0
        %1797 = vmatpush1.msra.mxu0 0.0
        %1798 = vmatprep.subr.mxu0 0.0
        %1799 = vmatpush1.msra.mxu0 0.0
        %1800 = vmatprep.subr.mxu0 0.0
        %1801 = vmatpush1.msra.mxu0 0.0
        %1802 = vmatprep.subr.mxu0 0.0
        %1803 = vmatpush1.msra.mxu0 0.0
        %1804 = vmatprep.subr.mxu0 0.0
        %1805 = vmatpush1.msra.mxu0 0.0
        %1806 = vmatprep.subr.mxu0 0.0
        %1807 = vmatpush1.msra.mxu0 0.0
        %1808 = vmatprep.subr.mxu0 0.0
        %1809 = vmatpush1.msra.mxu0 0.0
        %1810 = vmatprep.subr.mxu0 0.0
        %1811 = vmatpush1.msra.mxu0 0.0
        %1812 = vmatprep.subr.mxu0 0.0
        %1813 = vmatpush1.msra.mxu0 0.0
        %1814 = vmatprep.subr.mxu0 0.0
        %1815 = vmatpush1.msra.mxu0 0.0
        %1816 = vmatprep.subr.mxu0 0.0
        %1817 = vmatpush1.msra.mxu0 0.0
        %1818 = vmatprep.subr.mxu0 0.0
        %1819 = vmatpush1.msra.mxu0 0.0
        %1820 = vmatprep.subr.mxu0 0.0
        %1821 = vmatpush1.msra.mxu0 0.0
        %1822 = vmatprep.subr.mxu0 0.0
        %1823 = vmatpush1.msra.mxu0 0.0
        %1824 = vmatprep.subr.mxu0 0.0
        %1825 = vmatpush1.msra.mxu0 0.0
        %1826 = vmatprep.mubr.f32.mxu0 0.0
        %1827 = vmatmul.mubr.f32.gmra.mrb[0].mxu0 %v1760
        %v1828 = vpop.f32.mrb[0].mxu0
        %v1829 = vadd.f32 %v697, %v1828
        %v1830 = vpop.f32.mrb[0].mxu0
        %1831 = vdwg.mxu0
        %v1832 = vxor.u32 %v1829, 2147483648
        %v1833 = vmul.f32 %v1832, 1.442695
        %v1834 = vpow.pop %v1833
        %v1835 = vadd.f32 %v1834, 1.0
        %v1836 = vrcp.pop %v1835
        %v1837 = vmul.f32 1.0, %v1836
        %s1838 = scalar_lea.vmem %s452, 24 [#allocation8]
        %1839 = vst.msk [vmem:[%s1838] sm:$0xff] %vm777, %v1837
        %1840 = vmatprep.subr.mxu0 0.0
        %1841 = vmatpush1.msra.mxu0 %v491
        %1842 = vmatprep.subr.mxu0 0.0
        %1843 = vmatpush1.msra.mxu0 %v492
        %1844 = vmatprep.subr.mxu0 0.0
        %1845 = vmatpush1.msra.mxu0 %v493
        %1846 = vmatprep.subr.mxu0 0.0
        %1847 = vmatpush1.msra.mxu0 %v494
        %1848 = vmatprep.subr.mxu0 0.0
        %1849 = vmatpush1.msra.mxu0 0.0
        %1850 = vmatprep.subr.mxu0 0.0
        %1851 = vmatpush1.msra.mxu0 0.0
        %1852 = vmatprep.subr.mxu0 0.0
        %1853 = vmatpush1.msra.mxu0 0.0
        %1854 = vmatprep.subr.mxu0 0.0
        %1855 = vmatpush1.msra.mxu0 0.0
        %1856 = vmatprep.subr.mxu0 0.0
        %1857 = vmatpush1.msra.mxu0 0.0
        %1858 = vmatprep.subr.mxu0 0.0
        %1859 = vmatpush1.msra.mxu0 0.0
        %1860 = vmatprep.subr.mxu0 0.0
        %1861 = vmatpush1.msra.mxu0 0.0
        %1862 = vmatprep.subr.mxu0 0.0
        %1863 = vmatpush1.msra.mxu0 0.0
        %1864 = vmatprep.subr.mxu0 0.0
        %1865 = vmatpush1.msra.mxu0 0.0
        %1866 = vmatprep.subr.mxu0 0.0
        %1867 = vmatpush1.msra.mxu0 0.0
        %1868 = vmatprep.subr.mxu0 0.0
        %1869 = vmatpush1.msra.mxu0 0.0
        %1870 = vmatprep.subr.mxu0 0.0
        %1871 = vmatpush1.msra.mxu0 0.0
        %1872 = vmatprep.subr.mxu0 0.0
        %1873 = vmatpush1.msra.mxu0 0.0
        %1874 = vmatprep.subr.mxu0 0.0
        %1875 = vmatpush1.msra.mxu0 0.0
        %1876 = vmatprep.subr.mxu0 0.0
        %1877 = vmatpush1.msra.mxu0 0.0
        %1878 = vmatprep.subr.mxu0 0.0
        %1879 = vmatpush1.msra.mxu0 0.0
        %1880 = vmatprep.subr.mxu0 0.0
        %1881 = vmatpush1.msra.mxu0 0.0
        %1882 = vmatprep.subr.mxu0 0.0
        %1883 = vmatpush1.msra.mxu0 0.0
        %1884 = vmatprep.subr.mxu0 0.0
        %1885 = vmatpush1.msra.mxu0 0.0
        %1886 = vmatprep.subr.mxu0 0.0
        %1887 = vmatpush1.msra.mxu0 0.0
        %1888 = vmatprep.subr.mxu0 0.0
        %1889 = vmatpush1.msra.mxu0 0.0
        %1890 = vmatprep.subr.mxu0 0.0
        %1891 = vmatpush1.msra.mxu0 0.0
        %1892 = vmatprep.subr.mxu0 0.0
        %1893 = vmatpush1.msra.mxu0 0.0
        %1894 = vmatprep.subr.mxu0 0.0
        %1895 = vmatpush1.msra.mxu0 0.0
        %1896 = vmatprep.subr.mxu0 0.0
        %1897 = vmatpush1.msra.mxu0 0.0
        %1898 = vmatprep.subr.mxu0 0.0
        %1899 = vmatpush1.msra.mxu0 0.0
        %1900 = vmatprep.subr.mxu0 0.0
        %1901 = vmatpush1.msra.mxu0 0.0
        %1902 = vmatprep.subr.mxu0 0.0
        %1903 = vmatpush1.msra.mxu0 0.0
        %1904 = vmatprep.mubr.f32.mxu0 0.0
        %1905 = vmatmul.mubr.f32.gmra.mrb[0].mxu0 %v1760
        %v1906 = vpop.f32.mrb[0].mxu0
        %v1907 = vadd.f32 %v783, %v1906
        %v1908 = vpop.f32.mrb[0].mxu0
        %1909 = vdwg.mxu0
        %v1910 = vsel %vm580, %v1907, -inf
        %1911 = vmax.xlane.f32.xlu0 %v1910
        %v1912 = vpop.xlane.xlu0 %1911
        %v1913 = vsub.f32 %v1907, %v1912
        %v1914 = vmul.f32 %v1913, 1.442695
        %v1915 = vpow.pop %v1914
        %v1916 = vsel %vm580, %v1915, 0.0
        %1917 = vadd.xlane.f32.xlu0 %v1916
        %v1918 = vpop.xlane.xlu0 %1917
        %v1919 = vrcp.pop %v1918
        %v1920 = vmul.f32 %v1915, %v1919
        %s1921 = scalar_lea.vmem %s459, 24 [#allocation9]
        %1922 = vst.msk [vmem:[%s1921] sm:$0xff] %vm580, %v1920
        %s1923 = sand.u32 %s280, 1
        %s1924 = sand.u32 %s280, 1
        %s1925 = smul.addr %s1924, 32
        %s1926 = scalar_lea.vmem [#allocation8], %s1925
        %s1927 = sand.u32 %s308, 1
        %s1928 = scalar_lea.sflag [#allocation7], %s1927
        %s1929 = sand.u32 %s308, 1
        %s1930 = smul.addr %s1929, 32
        %s1931 = scalar_lea.vmem [#allocation9], %s1930
        // Predicated region
        $region69: #{tpu_custom_call.1} parent=59 // pred_check
          %p1932 = pneg %p290
        $region70: #{tpu_custom_call.1} parent=59 // pred_check_branch
          %1934 = sbr.rel (%p1932) target = $region72
        $region71: #{tpu_custom_call.1} parent=59 // pred_region
          %s1935 = smul.u32 4, %s36
          %s1936 = smul.addr %s1935, 2
          %s1937 = sadd.s32 %s35, %s1936
          %s1938 = smul.addr %s1937, 8
          %s1939 = scalar_lea.vmem %s10, %s1938
          // Predicated region
          $region73: #{tpu_custom_call.1} parent=71 // pred_check
            _
          $region74: #{tpu_custom_call.1} parent=71 // pred_check_branch
            %1941 = sbr.rel (0) target = $region76
          $region75: #{tpu_custom_call.1} parent=71 // pred_region
            // Predicated region
            $region77: #{tpu_custom_call.1} parent=75 // pred_check
              _
            $region78: #{tpu_custom_call.1} parent=75 // pred_check_branch
              %1943 = sbr.rel (0) target = $region80
            $region79: #{tpu_custom_call.1} parent=75 // pred_region
              // Predicated region
              $region92: #{tpu_custom_call.1} parent=79 // pred_check
                _
              $region93: #{tpu_custom_call.1} parent=79 // pred_check_branch
                %1964 = sbr.rel (0) target = $region95
              $region94: #{tpu_custom_call.1} parent=79 // pred_region
                loop: start=0, step=1, limit=1
                $region96: #{tpu_custom_call.1} parent=94 // loop_pre_header
                  _
                $region97: #{tpu_custom_call.1} parent=94 // loop_header
                  %s1966 = sphi 0, %s1970
                  %p1967 = scmp.ge.s32.totalorder %s1966, 1
                  %s1971 = sphi %s1926, %s1926
                  %s1972 = sphi %s1939, %s1939
                $region98: #{tpu_custom_call.1} parent=94 // loop_header_branch
                  %1969 = sbr.rel (%p1967) target = $region102
                $region99: #{tpu_custom_call.1} parent=94 // loop_body
                  %v1973 = vld [vmem:[%s1971] sm:$0xff]
                  %1974 = vst [vmem:[%s1972] sm:$0xff] %v1973
                  %v1975 = vld [vmem:[%s1971 + $0x8] sm:$0xff]
                  %1976 = vst [vmem:[%s1972 + $0x10] sm:$0xff] %v1975
                  %v1977 = vld [vmem:[%s1971 + $0x10] sm:$0xff]
                  %1978 = vst [vmem:[%s1972 + $0x20] sm:$0xff] %v1977
                  %v1979 = vld [vmem:[%s1971 + $0x18] sm:$0xff]
                  %1980 = vst [vmem:[%s1972 + $0x30] sm:$0xff] %v1979
                $region100: #{tpu_custom_call.1} parent=94 // loop_footer
                  %s1970 = sadd.s32 1, %s1966
                $region101: #{tpu_custom_call.1} parent=94 // loop_footer_branch
                  %1965 = sbr.rel target = $region97
                $region102: #{tpu_custom_call.1} parent=94 // loop_exit
                  _
              $region95: #{tpu_custom_call.1} parent=79 // pred_fallthru
                _
              // Predicated region
              $region103: #{tpu_custom_call.1} parent=79 // pred_check
                _
              $region104: #{tpu_custom_call.1} parent=79 // pred_check_branch
                %1982 = sbr.rel target = $region106
              $region105: #{tpu_custom_call.1} parent=79 // pred_region
                _
              $region106: #{tpu_custom_call.1} parent=79 // pred_fallthru
                _
            $region80: #{tpu_custom_call.1} parent=75 // pred_fallthru
              _
            // Predicated region
            $region81: #{tpu_custom_call.1} parent=75 // pred_check
              _
            $region82: #{tpu_custom_call.1} parent=75 // pred_check_branch
              %1945 = sbr.rel target = $region84
            $region83: #{tpu_custom_call.1} parent=75 // pred_region
              loop: start=0, step=1, limit=1
              $region85: #{tpu_custom_call.1} parent=83 // loop_pre_header
                _
              $region86: #{tpu_custom_call.1} parent=83 // loop_header
                %s1948 = sphi 0, %s1952
                %p1949 = scmp.ge.s32.totalorder %s1948, 1
                %s1953 = sphi %s1926, %s1926
                %s1954 = sphi %s1939, %s1939
              $region87: #{tpu_custom_call.1} parent=83 // loop_header_branch
                %1951 = sbr.rel (%p1949) target = $region91
              $region88: #{tpu_custom_call.1} parent=83 // loop_body
                %v1955 = vld [vmem:[%s1953] sm:$0xff]
                %1956 = vst [vmem:[%s1954] sm:$0xff] %v1955
                %v1957 = vld [vmem:[%s1953 + $0x8] sm:$0xff]
                %1958 = vst [vmem:[%s1954 + $0x10] sm:$0xff] %v1957
                %v1959 = vld [vmem:[%s1953 + $0x10] sm:$0xff]
                %1960 = vst [vmem:[%s1954 + $0x20] sm:$0xff] %v1959
                %v1961 = vld [vmem:[%s1953 + $0x18] sm:$0xff]
                %1962 = vst [vmem:[%s1954 + $0x30] sm:$0xff] %v1961
              $region89: #{tpu_custom_call.1} parent=83 // loop_footer
                %s1952 = sadd.s32 1, %s1948
              $region90: #{tpu_custom_call.1} parent=83 // loop_footer_branch
                %1947 = sbr.rel target = $region86
              $region91: #{tpu_custom_call.1} parent=83 // loop_exit
                _
            $region84: #{tpu_custom_call.1} parent=75 // pred_fallthru
              _
          $region76: #{tpu_custom_call.1} parent=71 // pred_fallthru
            _
          %1983 = vnop
        $region72: #{tpu_custom_call.1} parent=59 // pred_fallthru
          _
        // Predicated region
        $region107: #{tpu_custom_call.1} parent=59 // pred_check
          %p1984 = pneg %p318
        $region108: #{tpu_custom_call.1} parent=59 // pred_check_branch
          %1986 = sbr.rel (%p1984) target = $region110
        $region109: #{tpu_custom_call.1} parent=59 // pred_region
          %s1987 = smul.u32 4, %s36
          %s1989 = ssub.s32 512, 512
          %1990 = vsyncadd %s1928, %s1989
          %s1991 = smul.addr %s1987, 2
          %s1992 = sadd.s32 %s35, %s1991
          %s1993 = smul.addr %s1992, 128
          %s1994 = scalar_lea.hbm %s11, %s1993
          %s1995 = sshll.u32 %s1931, 4
          %s1996 = int_to_ptr.vmem [resolvable:$true] %s1995
          %2001 = dma.vmem_to_hbm [thread:$0]  %s1996, 512, %s1994, %s1928, 128, 256, 8
        $region110: #{tpu_custom_call.1} parent=59 // pred_fallthru
          _
      $region60: #{tpu_custom_call.1} parent=5 // pred_fallthru
        _
      %p2002 = scmp.le.s32.totalorder 2, %s26
      // Predicated region
      $region111: #{tpu_custom_call.1} parent=5 // pred_check
        %p2003 = pneg %p2002
      $region112: #{tpu_custom_call.1} parent=5 // pred_check_branch
        %2005 = sbr.rel (%p2003) target = $region114
      $region113: #{tpu_custom_call.1} parent=5 // pred_region
        %s2006 = ssub.s32 %s26, 2
        // Predicated region
        $region115: #{tpu_custom_call.1} parent=113 // pred_check
          %p2007 = pneg %p296
        $region116: #{tpu_custom_call.1} parent=113 // pred_check_branch
          %2009 = sbr.rel (%p2007) target = $region118
        $region117: #{tpu_custom_call.1} parent=113 // pred_region
          %s2010 = sand.u32 %s281, 1
          %s2011 = sand.u32 %s281, 1
          %s2012 = smul.addr %s2011, 32
          %s2013 = scalar_lea.vmem [#allocation8], %s2012
        $region118: #{tpu_custom_call.1} parent=113 // pred_fallthru
          _
        // Predicated region
        $region119: #{tpu_custom_call.1} parent=113 // pred_check
          %p2014 = pneg %p324
        $region120: #{tpu_custom_call.1} parent=113 // pred_check_branch
          %2016 = sbr.rel (%p2014) target = $region122
        $region121: #{tpu_custom_call.1} parent=113 // pred_region
          %s2017 = sand.u32 %s309, 1
          %s2018 = scalar_lea.sflag [#allocation7], %s2017
          %s2019 = sand.u32 %s309, 1
          %s2020 = smul.addr %s2019, 32
          %s2021 = scalar_lea.vmem [#allocation9], %s2020
          %2022 = dma.done %s2018, 512
        $region122: #{tpu_custom_call.1} parent=113 // pred_fallthru
          _
      $region114: #{tpu_custom_call.1} parent=5 // pred_fallthru
        _
    $region6: #{tpu_custom_call.1} parent=1 // loop_footer
      %s30 = sadd.s32 1, %s26
    $region7: #{tpu_custom_call.1} parent=1 // loop_footer_branch
      %25 = sbr.rel target = $region3
    $region8: #{tpu_custom_call.1} parent=1 // loop_exit
      _
    %2023 = vsyncpa [#allocation6], 1
    %s2024 = scalar_lea.sflag [#allocation6], 1
    %2025 = vsyncpa %s2024, 1
    %2026 = vsyncpa [#allocation7], 1
    %s2027 = scalar_lea.sflag [#allocation7], 1
    %2028 = vsyncpa %s2027, 1

</llo_original>
